<compile_context>
chip_gen: v7x
topology: tpu7x:2x2x1
jax: 0.10.0
libtpu: 0.0.40
codegen_flags: <defaults>
</compile_context>

<pallas_src>
import functools

import jax
import jax.numpy as jnp
from jax import lax
from jax.experimental import pallas as pl
from jax.experimental.pallas import tpu as pltpu

EPS = 1e-5                      # nn.LayerNorm default
MATMUL_DTYPE = jnp.bfloat16     # MXU input dtype; accumulation is always f32


def _layernorm(z, g, b):
    mu = jnp.mean(z, axis=-1, keepdims=True)
    var = jnp.mean((z - mu) ** 2, axis=-1, keepdims=True)
    return (z - mu) * lax.rsqrt(var + EPS) * g + b


def _gelu_exact(z):
    # PyTorch nn.GELU() default: exact erf-based GELU.
    return 0.5 * z * (1.0 + lax.erf(z * 0.7071067811865476))


def encoder_kernel(x_ref, g1_ref, b1_ref, wqkv_ref, wo_ref, bo_ref,
                   g2_ref, b2_ref, w1_ref, c1_ref, w2_ref, c2_ref,
                   o_ref, x_sc, *, heads):
    """One (batch element, layer) grid step.

    x_ref/o_ref: (1, N, D) tiles; weight refs hold one layer's full matrices.
    x_sc: (1, N, D) f32 scratch holding the running activation across layers.
    """
    layer = pl.program_id(1)
    n_layers = pl.num_programs(1)

    @pl.when(layer == 0)
    def _():
        x_sc[...] = x_ref[...].astype(jnp.float32)

    x = x_sc[0]                                   # (N, D) float32
    N, D = x.shape
    dh = D // heads
    scale = dh ** -0.5

    # ---------------- PreNorm + MSA (fused QKV) ----------------
    xn = _layernorm(x, g1_ref[0], b1_ref[0])      # (N, D) f32
    qkv = jnp.dot(xn.astype(MATMUL_DTYPE), wqkv_ref[0],
                  preferred_element_type=jnp.float32)            # (N, 3D) f32
    q = qkv[:, :D] * scale                        # fold 1/sqrt(dh) into q
    k = qkv[:, D:2 * D]
    v = qkv[:, 2 * D:]

    # (N, D) -> (heads, N, dh): stack per-head lane slices along a new leading
    # (batch) axis so attention runs as two head-batched dot_generals.
    qh = jnp.stack([q[:, h * dh:(h + 1) * dh] for h in range(heads)],
                   axis=0).astype(MATMUL_DTYPE)
    kh = jnp.stack([k[:, h * dh:(h + 1) * dh] for h in range(heads)],
                   axis=0).astype(MATMUL_DTYPE)
    vh = jnp.stack([v[:, h * dh:(h + 1) * dh] for h in range(heads)],
                   axis=0).astype(MATMUL_DTYPE)

    scores = jnp.einsum("hqd,hkd->hqk", qh, kh,
                        preferred_element_type=jnp.float32)      # (heads, N, N)
    scores = scores - jnp.max(scores, axis=-1, keepdims=True)
    e = jnp.exp(scores)
    denom = jnp.sum(e, axis=-1, keepdims=True)
    attn = e * pl.reciprocal(denom, approx=True)                 # EUP reciprocal
    ctx = jnp.einsum("hqk,hkd->hqd", attn.astype(MATMUL_DTYPE), vh,
                     preferred_element_type=jnp.float32)         # (heads, N, dh)
    ctx = jnp.concatenate([ctx[h] for h in range(heads)], axis=-1)  # (N, D)

    attn_out = jnp.dot(ctx.astype(MATMUL_DTYPE), wo_ref[0],
                       preferred_element_type=jnp.float32) + bo_ref[0]
    x = x + attn_out                              # residual 1

    # ---------------- PreNorm + FeedForward ----------------
    xn2 = _layernorm(x, g2_ref[0], b2_ref[0])
    h = jnp.dot(xn2.astype(MATMUL_DTYPE), w1_ref[0],
                preferred_element_type=jnp.float32) + c1_ref[0]
    h = _gelu_exact(h)
    y = jnp.dot(h.astype(MATMUL_DTYPE), w2_ref[0],
                preferred_element_type=jnp.float32) + c2_ref[0]
    x = x + y                                     # residual 2

    x_sc[0] = x                                   # carry to next layer

    @pl.when(layer == n_layers - 1)
    def _():
        o_ref[0] = x.astype(o_ref.dtype)


def transformer_encoder(x, params, heads, *, vmem_limit_mb=64):
    """x: (B, N, D) float32. params: list (length=depth) of per-layer dicts."""
    B, N, D = x.shape

    def stack(name, dtype=None):
        w = jnp.stack([p[name] for p in params], axis=0)
        return w.astype(dtype) if dtype is not None else w

    # Stack per-layer weights along a leading "layer" axis; matmul weights in
    # bf16 (halves HBM traffic / VMEM footprint), LN params & biases in f32.
    ln1_g = stack("ln1_g")                                           # (L, 1, D)
    ln1_b = stack("ln1_b")
    wqkv = jnp.concatenate([stack("wq"), stack("wk"), stack("wv")],
                           axis=-1).astype(MATMUL_DTYPE)             # (L, D, 3D)
    wo = stack("wo", MATMUL_DTYPE)                                   # (L, D, D)
    bo = stack("bo")                                                 # (L, 1, D)
    ln2_g = stack("ln2_g")
    ln2_b = stack("ln2_b")
    w1 = stack("w1", MATMUL_DTYPE)                                   # (L, D, H)
    b1 = stack("b1")                                                 # (L, 1, H)
    w2 = stack("w2", MATMUL_DTYPE)                                   # (L, H, D)
    b2 = stack("b2")                                                 # (L, 1, D)
    weights = [ln1_g, ln1_b, wqkv, wo, bo, ln2_g, ln2_b, w1, b1, w2, b2]
    depth = wqkv.shape[0]

    def layer_spec(w):
        blk = (1,) + tuple(w.shape[1:])
        return pl.BlockSpec(blk, lambda b, l: (l, 0, 0))

    in_specs = [pl.BlockSpec((1, N, D), lambda b, l: (b, 0, 0))] + \
               [layer_spec(w) for w in weights]
    out_specs = pl.BlockSpec((1, N, D), lambda b, l: (b, 0, 0))

    return pl.pallas_call(
        functools.partial(encoder_kernel, heads=heads),
        out_shape=jax.ShapeDtypeStruct((B, N, D), x.dtype),
        grid=(B, depth),
        in_specs=in_specs,
        out_specs=out_specs,
        scratch_shapes=[pltpu.VMEM((1, N, D), jnp.float32)],
        compiler_params=pltpu.CompilerParams(
            dimension_semantics=("parallel", "arbitrary"),
            vmem_limit_bytes=vmem_limit_mb * 1024 * 1024,
        ),
    )(x, *weights)


# ----- deterministic parameter init (shapes from the PyTorch __init__) -----
def init_params(key, depth, dim, mlp_dim):
    params = []
    for _ in range(depth):
        key, *ks = jax.random.split(key, 10)
        scale = 0.02
        layer = {
            "ln1_g": jnp.ones((1, dim), jnp.float32),
            "ln1_b": jnp.zeros((1, dim), jnp.float32),
            # projections stored as (in, out): kernel computes x @ W
            "wq": scale * jax.random.normal(ks[0], (dim, dim), jnp.float32),
            "wk": scale * jax.random.normal(ks[1], (dim, dim), jnp.float32),
            "wv": scale * jax.random.normal(ks[2], (dim, dim), jnp.float32),
            "wo": scale * jax.random.normal(ks[3], (dim, dim), jnp.float32),
            "bo": scale * jax.random.normal(ks[4], (1, dim), jnp.float32),
            "ln2_g": jnp.ones((1, dim), jnp.float32),
            "ln2_b": jnp.zeros((1, dim), jnp.float32),
            "w1": scale * jax.random.normal(ks[5], (dim, mlp_dim), jnp.float32),
            "b1": scale * jax.random.normal(ks[6], (1, mlp_dim), jnp.float32),
            "w2": scale * jax.random.normal(ks[7], (mlp_dim, dim), jnp.float32),
            "b2": scale * jax.random.normal(ks[8], (1, dim), jnp.float32),
        }
        params.append(layer)
    return params


# ----- pure-JAX f32 reference for correctness check -----
def reference_forward(x, params, heads):
    def ln(z, g, b):
        mu = jnp.mean(z, axis=-1, keepdims=True)
        var = jnp.mean((z - mu) ** 2, axis=-1, keepdims=True)
        return (z - mu) / jnp.sqrt(var + EPS) * g[0] + b[0]

    B, N, D = x.shape
    dh = D // heads
    for p in params:
        xn = ln(x, p["ln1_g"], p["ln1_b"])
        q = xn @ p["wq"]; k = xn @ p["wk"]; v = xn @ p["wv"]
        q = q.reshape(B, N, heads, dh).transpose(0, 2, 1, 3)
        k = k.reshape(B, N, heads, dh).transpose(0, 2, 1, 3)
        v = v.reshape(B, N, heads, dh).transpose(0, 2, 1, 3)
        dots = jnp.einsum("bhnd,bhmd->bhnm", q, k) * (dh ** -0.5)
        attn = jax.nn.softmax(dots, axis=-1)
        out = jnp.einsum("bhnm,bhmd->bhnd", attn, v)
        out = out.transpose(0, 2, 1, 3).reshape(B, N, D)
        x = x + out @ p["wo"] + p["bo"][0]
        xn2 = ln(x, p["ln2_g"], p["ln2_b"])
        h = xn2 @ p["w1"] + p["b1"][0]
        h = 0.5 * h * (1.0 + jax.scipy.special.erf(h / jnp.sqrt(2.0)))
        x = x + h @ p["w2"] + p["b2"][0]
    return x


if __name__ == "__main__":
    B, N, D, heads, mlp_dim, depth = 2, 8, 32, 4, 64, 2

    key = jax.random.PRNGKey(0)
    kx, kp = jax.random.split(key)
    x = jax.random.normal(kx, (B, N, D), jnp.float32)
    params = init_params(kp, depth, D, mlp_dim)

    out = transformer_encoder(x, params, heads)
    out = jax.block_until_ready(out)

    ref = reference_forward(x, params, heads)
    assert out.shape == (B, N, D)
    # bf16 MXU inputs + approx reciprocal => small deviation from f32 reference.
    max_err = float(jnp.max(jnp.abs(out - ref)))
    assert jnp.allclose(out, ref, rtol=2e-2, atol=2e-2), \
        f"mismatch vs reference (max abs err {max_err})"

    # TODO(synk): for D < 128 a lane-dense (>=128-wide) output packing (multiple
    # batch rows per store slab) would further speed up the store epilogue.
    print("KERNEL_OK")
</pallas_src>

<mosaic_0001>
module attributes {stable_mosaic.version = 11 : i64} {
  func.func @encoder_kernel(%arg0: i32, %arg1: i32, %arg2: memref<1x8x32xf32, #tpu.memory_space<vmem>>, %arg3: memref<1x1x32xf32, #tpu.memory_space<vmem>>, %arg4: memref<1x1x32xf32, #tpu.memory_space<vmem>>, %arg5: memref<1x32x96xbf16, #tpu.memory_space<vmem>>, %arg6: memref<1x32x32xbf16, #tpu.memory_space<vmem>>, %arg7: memref<1x1x32xf32, #tpu.memory_space<vmem>>, %arg8: memref<1x1x32xf32, #tpu.memory_space<vmem>>, %arg9: memref<1x1x32xf32, #tpu.memory_space<vmem>>, %arg10: memref<1x32x64xbf16, #tpu.memory_space<vmem>>, %arg11: memref<1x1x64xf32, #tpu.memory_space<vmem>>, %arg12: memref<1x64x32xbf16, #tpu.memory_space<vmem>>, %arg13: memref<1x1x32xf32, #tpu.memory_space<vmem>>, %arg14: memref<1x8x32xf32, #tpu.memory_space<vmem>>, %arg15: memref<1x8x32xf32, #tpu.memory_space<vmem>>) attributes {dimension_semantics = [#tpu.dimension_semantics<parallel>, #tpu.dimension_semantics<arbitrary>], iteration_bounds = array<i64: 2, 2>, scalar_prefetch = 0 : i64, scratch_operands = 1 : i64, tpu.core_type = #tpu.core_type<tc>, window_params = [{transform_indices = @transform_0, window_bounds = array<i64: 1, 8, 32>}, {transform_indices = @transform_1, window_bounds = array<i64: 1, 1, 32>}, {transform_indices = @transform_2, window_bounds = array<i64: 1, 1, 32>}, {transform_indices = @transform_3, window_bounds = array<i64: 1, 32, 96>}, {transform_indices = @transform_4, window_bounds = array<i64: 1, 32, 32>}, {transform_indices = @transform_5, window_bounds = array<i64: 1, 1, 32>}, {transform_indices = @transform_6, window_bounds = array<i64: 1, 1, 32>}, {transform_indices = @transform_7, window_bounds = array<i64: 1, 1, 32>}, {transform_indices = @transform_8, window_bounds = array<i64: 1, 32, 64>}, {transform_indices = @transform_9, window_bounds = array<i64: 1, 1, 64>}, {transform_indices = @transform_10, window_bounds = array<i64: 1, 64, 32>}, {transform_indices = @transform_11, window_bounds = array<i64: 1, 1, 32>}, {transform_indices = @transform_12, window_bounds = array<i64: 1, 8, 32>}]} {
    %c0_i32 = arith.constant 0 : i32
    %0 = arith.cmpi eq, %arg1, %c0_i32 : i32
    %1 = arith.extui %0 : i1 to i32
    %c0_i32_0 = arith.constant 0 : i32
    %2 = arith.cmpi ne, %1, %c0_i32_0 : i32
    scf.if %2 {
      %c0_61 = arith.constant 0 : index
      %c0_62 = arith.constant 0 : index
      %c0_63 = arith.constant 0 : index
      %158 = vector.load %arg2[%c0_61, %c0_62, %c0_63] : memref<1x8x32xf32, #tpu.memory_space<vmem>>, vector<1x8x32xf32>
      %c0_64 = arith.constant 0 : index
      %c0_65 = arith.constant 0 : index
      %c0_66 = arith.constant 0 : index
      %159 = vector.load %arg15[%c0_64, %c0_65, %c0_66] : memref<1x8x32xf32, #tpu.memory_space<vmem>>, vector<1x8x32xf32>
      tpu.vector_store %arg15[%c0_64, %c0_65, %c0_66], %158 {strides = array<i32>} : memref<1x8x32xf32, #tpu.memory_space<vmem>>, vector<1x8x32xf32>,
    } else {
    }
    %c0 = arith.constant 0 : index
    %c0_1 = arith.constant 0 : index
    %c0_2 = arith.constant 0 : index
    %3 = vector.load %arg15[%c0, %c0_1, %c0_2] : memref<1x8x32xf32, #tpu.memory_space<vmem>>, vector<1x8x32xf32>
    %4 = vector.shape_cast %3 : vector<1x8x32xf32> to vector<8x32xf32>
    %c0_3 = arith.constant 0 : index
    %c0_4 = arith.constant 0 : index
    %c0_5 = arith.constant 0 : index
    %5 = vector.load %arg3[%c0_3, %c0_4, %c0_5] : memref<1x1x32xf32, #tpu.memory_space<vmem>>, vector<1x1x32xf32>
    %6 = vector.shape_cast %5 : vector<1x1x32xf32> to vector<1x32xf32>
    %c0_6 = arith.constant 0 : index
    %c0_7 = arith.constant 0 : index
    %c0_8 = arith.constant 0 : index
    %7 = vector.load %arg4[%c0_6, %c0_7, %c0_8] : memref<1x1x32xf32, #tpu.memory_space<vmem>>, vector<1x1x32xf32>
    %8 = vector.shape_cast %7 : vector<1x1x32xf32> to vector<1x32xf32>
    %cst = arith.constant dense<0.000000e+00> : vector<8xf32>
    %9 = vector.multi_reduction <add>, %4, %cst [1] : vector<8x32xf32> to vector<8xf32>
    %10 = vector.shape_cast %9 : vector<8xf32> to vector<8x1xf32>
    %cst_9 = arith.constant 3.200000e+01 : f32
    %11 = vector.broadcast %cst_9 : f32 to vector<8x1xf32>
    %12 = arith.divf %10, %11 : vector<8x1xf32>
    %13 = vector.broadcast %12 : vector<8x1xf32> to vector<8x32xf32>
    %14 = arith.subf %4, %13 : vector<8x32xf32>
    %15 = arith.mulf %14, %14 : vector<8x32xf32>
    %cst_10 = arith.constant dense<0.000000e+00> : vector<8xf32>
    %16 = vector.multi_reduction <add>, %15, %cst_10 [1] : vector<8x32xf32> to vector<8xf32>
    %17 = vector.shape_cast %16 : vector<8xf32> to vector<8x1xf32>
    %cst_11 = arith.constant 3.200000e+01 : f32
    %18 = vector.broadcast %cst_11 : f32 to vector<8x1xf32>
    %19 = arith.divf %17, %18 : vector<8x1xf32>
    %20 = vector.broadcast %12 : vector<8x1xf32> to vector<8x32xf32>
    %21 = arith.subf %4, %20 : vector<8x32xf32>
    %cst_12 = arith.constant 9.99999974E-6 : f32
    %22 = vector.broadcast %cst_12 : f32 to vector<8x1xf32>
    %23 = arith.addf %19, %22 : vector<8x1xf32>
    %24 = math.rsqrt %23 : vector<8x1xf32>
    %25 = vector.broadcast %24 : vector<8x1xf32> to vector<8x32xf32>
    %26 = arith.mulf %21, %25 : vector<8x32xf32>
    %27 = vector.broadcast %6 : vector<1x32xf32> to vector<8x32xf32>
    %28 = arith.mulf %26, %27 : vector<8x32xf32>
    %29 = vector.broadcast %8 : vector<1x32xf32> to vector<8x32xf32>
    %30 = arith.addf %28, %29 : vector<8x32xf32>
    %31 = arith.truncf %30 : vector<8x32xf32> to vector<8x32xbf16>
    %c0_13 = arith.constant 0 : index
    %c0_14 = arith.constant 0 : index
    %c0_15 = arith.constant 0 : index
    %32 = vector.load %arg5[%c0_13, %c0_14, %c0_15] : memref<1x32x96xbf16, #tpu.memory_space<vmem>>, vector<1x32x96xbf16>
    %33 = vector.shape_cast %32 : vector<1x32x96xbf16> to vector<32x96xbf16>
    %cst_16 = arith.constant dense<0.000000e+00> : vector<8x96xf32>
    %34 = tpu.matmul %31, %33, %cst_16 {dimension_numbers = #tpu.dot_dimension_numbers<[1], [0], [0], [1], [0, 0, 1, 1], [], []>} : vector<8x32xbf16>, vector<32x96xbf16>, vector<8x96xf32> -> vector<8x96xf32>
    %35 = vector.extract_strided_slice %34 {offsets = [0, 0], sizes = [8, 32], strides = [1, 1]} : vector<8x96xf32> to vector<8x32xf32>
    %cst_17 = arith.constant 0.353553385 : f32
    %36 = vector.broadcast %cst_17 : f32 to vector<8x32xf32>
    %37 = arith.mulf %35, %36 : vector<8x32xf32>
    %38 = vector.extract_strided_slice %34 {offsets = [0, 32], sizes = [8, 32], strides = [1, 1]} : vector<8x96xf32> to vector<8x32xf32>
    %39 = vector.extract_strided_slice %34 {offsets = [0, 64], sizes = [8, 32], strides = [1, 1]} : vector<8x96xf32> to vector<8x32xf32>
    %40 = vector.extract_strided_slice %37 {offsets = [0, 0], sizes = [8, 8], strides = [1, 1]} : vector<8x32xf32> to vector<8x8xf32>
    %41 = vector.extract_strided_slice %37 {offsets = [0, 8], sizes = [8, 8], strides = [1, 1]} : vector<8x32xf32> to vector<8x8xf32>
    %42 = vector.extract_strided_slice %37 {offsets = [0, 16], sizes = [8, 8], strides = [1, 1]} : vector<8x32xf32> to vector<8x8xf32>
    %43 = vector.extract_strided_slice %37 {offsets = [0, 24], sizes = [8, 8], strides = [1, 1]} : vector<8x32xf32> to vector<8x8xf32>
    %44 = vector.shape_cast %40 : vector<8x8xf32> to vector<1x8x8xf32>
    %45 = vector.shape_cast %41 : vector<8x8xf32> to vector<1x8x8xf32>
    %46 = vector.shape_cast %42 : vector<8x8xf32> to vector<1x8x8xf32>
    %47 = vector.shape_cast %43 : vector<8x8xf32> to vector<1x8x8xf32>
    %48 = tpu.concatenate %44, %45, %46, %47 in 0 : vector<1x8x8xf32>, vector<1x8x8xf32>, vector<1x8x8xf32>, vector<1x8x8xf32> -> vector<4x8x8xf32>
    %49 = arith.truncf %48 : vector<4x8x8xf32> to vector<4x8x8xbf16>
    %50 = vector.extract_strided_slice %38 {offsets = [0, 0], sizes = [8, 8], strides = [1, 1]} : vector<8x32xf32> to vector<8x8xf32>
    %51 = vector.extract_strided_slice %38 {offsets = [0, 8], sizes = [8, 8], strides = [1, 1]} : vector<8x32xf32> to vector<8x8xf32>
    %52 = vector.extract_strided_slice %38 {offsets = [0, 16], sizes = [8, 8], strides = [1, 1]} : vector<8x32xf32> to vector<8x8xf32>
    %53 = vector.extract_strided_slice %38 {offsets = [0, 24], sizes = [8, 8], strides = [1, 1]} : vector<8x32xf32> to vector<8x8xf32>
    %54 = vector.shape_cast %50 : vector<8x8xf32> to vector<1x8x8xf32>
    %55 = vector.shape_cast %51 : vector<8x8xf32> to vector<1x8x8xf32>
    %56 = vector.shape_cast %52 : vector<8x8xf32> to vector<1x8x8xf32>
    %57 = vector.shape_cast %53 : vector<8x8xf32> to vector<1x8x8xf32>
    %58 = tpu.concatenate %54, %55, %56, %57 in 0 : vector<1x8x8xf32>, vector<1x8x8xf32>, vector<1x8x8xf32>, vector<1x8x8xf32> -> vector<4x8x8xf32>
    %59 = arith.truncf %58 : vector<4x8x8xf32> to vector<4x8x8xbf16>
    %60 = vector.extract_strided_slice %39 {offsets = [0, 0], sizes = [8, 8], strides = [1, 1]} : vector<8x32xf32> to vector<8x8xf32>
    %61 = vector.extract_strided_slice %39 {offsets = [0, 8], sizes = [8, 8], strides = [1, 1]} : vector<8x32xf32> to vector<8x8xf32>
    %62 = vector.extract_strided_slice %39 {offsets = [0, 16], sizes = [8, 8], strides = [1, 1]} : vector<8x32xf32> to vector<8x8xf32>
    %63 = vector.extract_strided_slice %39 {offsets = [0, 24], sizes = [8, 8], strides = [1, 1]} : vector<8x32xf32> to vector<8x8xf32>
    %64 = vector.shape_cast %60 : vector<8x8xf32> to vector<1x8x8xf32>
    %65 = vector.shape_cast %61 : vector<8x8xf32> to vector<1x8x8xf32>
    %66 = vector.shape_cast %62 : vector<8x8xf32> to vector<1x8x8xf32>
    %67 = vector.shape_cast %63 : vector<8x8xf32> to vector<1x8x8xf32>
    %68 = tpu.concatenate %64, %65, %66, %67 in 0 : vector<1x8x8xf32>, vector<1x8x8xf32>, vector<1x8x8xf32>, vector<1x8x8xf32> -> vector<4x8x8xf32>
    %69 = arith.truncf %68 : vector<4x8x8xf32> to vector<4x8x8xbf16>
    "tpu.trace_start"() <{level = 10 : i32, message = "hqd,hkd->hqk"}> : () -> ()
    %cst_18 = arith.constant dense<0.000000e+00> : vector<4x8x8xf32>
    %70 = tpu.matmul %49, %59, %cst_18 {dimension_numbers = #tpu.dot_dimension_numbers<[2], [2], [1], [1], [0, 0, 0, 1, 1, 1], [0], [0]>} : vector<4x8x8xbf16>, vector<4x8x8xbf16>, vector<4x8x8xf32> -> vector<4x8x8xf32>
    "tpu.trace_stop"() : () -> ()
    %cst_19 = arith.constant dense<0xFF800000> : vector<4x8xf32>
    %71 = vector.multi_reduction <maximumf>, %70, %cst_19 [2] : vector<4x8x8xf32> to vector<4x8xf32>
    %72 = vector.shape_cast %71 : vector<4x8xf32> to vector<4x8x1xf32>
    %73 = vector.broadcast %72 : vector<4x8x1xf32> to vector<4x8x8xf32>
    %74 = arith.subf %70, %73 : vector<4x8x8xf32>
    %75 = math.exp %74 : vector<4x8x8xf32>
    %cst_20 = arith.constant dense<0.000000e+00> : vector<4x8xf32>
    %76 = vector.multi_reduction <add>, %75, %cst_20 [2] : vector<4x8x8xf32> to vector<4x8xf32>
    %77 = vector.shape_cast %76 : vector<4x8xf32> to vector<4x8x1xf32>
    %78 = tpu.reciprocal %77 {approx = true} : vector<4x8x1xf32> -> vector<4x8x1xf32>
    %79 = vector.broadcast %78 : vector<4x8x1xf32> to vector<4x8x8xf32>
    %80 = arith.mulf %75, %79 : vector<4x8x8xf32>
    %81 = arith.truncf %80 : vector<4x8x8xf32> to vector<4x8x8xbf16>
    "tpu.trace_start"() <{level = 10 : i32, message = "hqk,hkd->hqd"}> : () -> ()
    %cst_21 = arith.constant dense<0.000000e+00> : vector<4x8x8xf32>
    %82 = tpu.matmul %81, %69, %cst_21 {dimension_numbers = #tpu.dot_dimension_numbers<[2], [1], [1], [2], [0, 0, 0, 1, 1, 2], [0], [0]>} : vector<4x8x8xbf16>, vector<4x8x8xbf16>, vector<4x8x8xf32> -> vector<4x8x8xf32>
    "tpu.trace_stop"() : () -> ()
    %83 = vector.extract_strided_slice %82 {offsets = [0, 0, 0], sizes = [1, 8, 8], strides = [1, 1, 1]} : vector<4x8x8xf32> to vector<1x8x8xf32>
    %84 = vector.shape_cast %83 : vector<1x8x8xf32> to vector<8x8xf32>
    %85 = vector.extract_strided_slice %82 {offsets = [1, 0, 0], sizes = [1, 8, 8], strides = [1, 1, 1]} : vector<4x8x8xf32> to vector<1x8x8xf32>
    %86 = vector.shape_cast %85 : vector<1x8x8xf32> to vector<8x8xf32>
    %87 = vector.extract_strided_slice %82 {offsets = [2, 0, 0], sizes = [1, 8, 8], strides = [1, 1, 1]} : vector<4x8x8xf32> to vector<1x8x8xf32>
    %88 = vector.shape_cast %87 : vector<1x8x8xf32> to vector<8x8xf32>
    %89 = vector.extract_strided_slice %82 {offsets = [3, 0, 0], sizes = [1, 8, 8], strides = [1, 1, 1]} : vector<4x8x8xf32> to vector<1x8x8xf32>
    %90 = vector.shape_cast %89 : vector<1x8x8xf32> to vector<8x8xf32>
    %91 = tpu.concatenate %84, %86, %88, %90 in 1 : vector<8x8xf32>, vector<8x8xf32>, vector<8x8xf32>, vector<8x8xf32> -> vector<8x32xf32>
    %92 = arith.truncf %91 : vector<8x32xf32> to vector<8x32xbf16>
    %c0_22 = arith.constant 0 : index
    %c0_23 = arith.constant 0 : index
    %c0_24 = arith.constant 0 : index
    %93 = vector.load %arg6[%c0_22, %c0_23, %c0_24] : memref<1x32x32xbf16, #tpu.memory_space<vmem>>, vector<1x32x32xbf16>
    %94 = vector.shape_cast %93 : vector<1x32x32xbf16> to vector<32x32xbf16>
    %cst_25 = arith.constant dense<0.000000e+00> : vector<8x32xf32>
    %95 = tpu.matmul %92, %94, %cst_25 {dimension_numbers = #tpu.dot_dimension_numbers<[1], [0], [0], [1], [0, 0, 1, 1], [], []>} : vector<8x32xbf16>, vector<32x32xbf16>, vector<8x32xf32> -> vector<8x32xf32>
    %c0_26 = arith.constant 0 : index
    %c0_27 = arith.constant 0 : index
    %c0_28 = arith.constant 0 : index
    %96 = vector.load %arg7[%c0_26, %c0_27, %c0_28] : memref<1x1x32xf32, #tpu.memory_space<vmem>>, vector<1x1x32xf32>
    %97 = vector.shape_cast %96 : vector<1x1x32xf32> to vector<1x32xf32>
    %98 = vector.broadcast %97 : vector<1x32xf32> to vector<8x32xf32>
    %99 = arith.addf %95, %98 : vector<8x32xf32>
    %100 = arith.addf %4, %99 : vector<8x32xf32>
    %c0_29 = arith.constant 0 : index
    %c0_30 = arith.constant 0 : index
    %c0_31 = arith.constant 0 : index
    %101 = vector.load %arg8[%c0_29, %c0_30, %c0_31] : memref<1x1x32xf32, #tpu.memory_space<vmem>>, vector<1x1x32xf32>
    %102 = vector.shape_cast %101 : vector<1x1x32xf32> to vector<1x32xf32>
    %c0_32 = arith.constant 0 : index
    %c0_33 = arith.constant 0 : index
    %c0_34 = arith.constant 0 : index
    %103 = vector.load %arg9[%c0_32, %c0_33, %c0_34] : memref<1x1x32xf32, #tpu.memory_space<vmem>>, vector<1x1x32xf32>
    %104 = vector.shape_cast %103 : vector<1x1x32xf32> to vector<1x32xf32>
    %cst_35 = arith.constant dense<0.000000e+00> : vector<8xf32>
    %105 = vector.multi_reduction <add>, %100, %cst_35 [1] : vector<8x32xf32> to vector<8xf32>
    %106 = vector.shape_cast %105 : vector<8xf32> to vector<8x1xf32>
    %cst_36 = arith.constant 3.200000e+01 : f32
    %107 = vector.broadcast %cst_36 : f32 to vector<8x1xf32>
    %108 = arith.divf %106, %107 : vector<8x1xf32>
    %109 = vector.broadcast %108 : vector<8x1xf32> to vector<8x32xf32>
    %110 = arith.subf %100, %109 : vector<8x32xf32>
    %111 = arith.mulf %110, %110 : vector<8x32xf32>
    %cst_37 = arith.constant dense<0.000000e+00> : vector<8xf32>
    %112 = vector.multi_reduction <add>, %111, %cst_37 [1] : vector<8x32xf32> to vector<8xf32>
    %113 = vector.shape_cast %112 : vector<8xf32> to vector<8x1xf32>
    %cst_38 = arith.constant 3.200000e+01 : f32
    %114 = vector.broadcast %cst_38 : f32 to vector<8x1xf32>
    %115 = arith.divf %113, %114 : vector<8x1xf32>
    %116 = vector.broadcast %108 : vector<8x1xf32> to vector<8x32xf32>
    %117 = arith.subf %100, %116 : vector<8x32xf32>
    %cst_39 = arith.constant 9.99999974E-6 : f32
    %118 = vector.broadcast %cst_39 : f32 to vector<8x1xf32>
    %119 = arith.addf %115, %118 : vector<8x1xf32>
    %120 = math.rsqrt %119 : vector<8x1xf32>
    %121 = vector.broadcast %120 : vector<8x1xf32> to vector<8x32xf32>
    %122 = arith.mulf %117, %121 : vector<8x32xf32>
    %123 = vector.broadcast %102 : vector<1x32xf32> to vector<8x32xf32>
    %124 = arith.mulf %122, %123 : vector<8x32xf32>
    %125 = vector.broadcast %104 : vector<1x32xf32> to vector<8x32xf32>
    %126 = arith.addf %124, %125 : vector<8x32xf32>
    %127 = arith.truncf %126 : vector<8x32xf32> to vector<8x32xbf16>
    %c0_40 = arith.constant 0 : index
    %c0_41 = arith.constant 0 : index
    %c0_42 = arith.constant 0 : index
    %128 = vector.load %arg10[%c0_40, %c0_41, %c0_42] : memref<1x32x64xbf16, #tpu.memory_space<vmem>>, vector<1x32x64xbf16>
    %129 = vector.shape_cast %128 : vector<1x32x64xbf16> to vector<32x64xbf16>
    %cst_43 = arith.constant dense<0.000000e+00> : vector<8x64xf32>
    %130 = tpu.matmul %127, %129, %cst_43 {dimension_numbers = #tpu.dot_dimension_numbers<[1], [0], [0], [1], [0, 0, 1, 1], [], []>} : vector<8x32xbf16>, vector<32x64xbf16>, vector<8x64xf32> -> vector<8x64xf32>
    %c0_44 = arith.constant 0 : index
    %c0_45 = arith.constant 0 : index
    %c0_46 = arith.constant 0 : index
    %131 = vector.load %arg11[%c0_44, %c0_45, %c0_46] : memref<1x1x64xf32, #tpu.memory_space<vmem>>, vector<1x1x64xf32>
    %132 = vector.shape_cast %131 : vector<1x1x64xf32> to vector<1x64xf32>
    %133 = vector.broadcast %132 : vector<1x64xf32> to vector<8x64xf32>
    %134 = arith.addf %130, %133 : vector<8x64xf32>
    %cst_47 = arith.constant 5.000000e-01 : f32
    %135 = vector.broadcast %cst_47 : f32 to vector<8x64xf32>
    %136 = arith.mulf %135, %134 : vector<8x64xf32>
    %cst_48 = arith.constant 0.707106769 : f32
    %137 = vector.broadcast %cst_48 : f32 to vector<8x64xf32>
    %138 = arith.mulf %134, %137 : vector<8x64xf32>
    %139 = math.erf %138 : vector<8x64xf32>
    %cst_49 = arith.constant 1.000000e+00 : f32
    %140 = vector.broadcast %cst_49 : f32 to vector<8x64xf32>
    %141 = arith.addf %140, %139 : vector<8x64xf32>
    %142 = arith.mulf %136, %141 : vector<8x64xf32>
    %143 = arith.truncf %142 : vector<8x64xf32> to vector<8x64xbf16>
    %c0_50 = arith.constant 0 : index
    %c0_51 = arith.constant 0 : index
    %c0_52 = arith.constant 0 : index
    %144 = vector.load %arg12[%c0_50, %c0_51, %c0_52] : memref<1x64x32xbf16, #tpu.memory_space<vmem>>, vector<1x64x32xbf16>
    %145 = vector.shape_cast %144 : vector<1x64x32xbf16> to vector<64x32xbf16>
    %cst_53 = arith.constant dense<0.000000e+00> : vector<8x32xf32>
    %146 = tpu.matmul %143, %145, %cst_53 {dimension_numbers = #tpu.dot_dimension_numbers<[1], [0], [0], [1], [0, 0, 1, 1], [], []>} : vector<8x64xbf16>, vector<64x32xbf16>, vector<8x32xf32> -> vector<8x32xf32>
    %c0_54 = arith.constant 0 : index
    %c0_55 = arith.constant 0 : index
    %c0_56 = arith.constant 0 : index
    %147 = vector.load %arg13[%c0_54, %c0_55, %c0_56] : memref<1x1x32xf32, #tpu.memory_space<vmem>>, vector<1x1x32xf32>
    %148 = vector.shape_cast %147 : vector<1x1x32xf32> to vector<1x32xf32>
    %149 = vector.broadcast %148 : vector<1x32xf32> to vector<8x32xf32>
    %150 = arith.addf %146, %149 : vector<8x32xf32>
    %151 = arith.addf %100, %150 : vector<8x32xf32>
    %c0_57 = arith.constant 0 : index
    %c0_58 = arith.constant 0 : index
    %c0_59 = arith.constant 0 : index
    %152 = vector.load %arg15[%c0_57, %c0_58, %c0_59] : memref<1x8x32xf32, #tpu.memory_space<vmem>>, vector<1x8x32xf32>
    %153 = vector.shape_cast %152 : vector<1x8x32xf32> to vector<8x32xf32>
    %154 = vector.shape_cast %151 : vector<8x32xf32> to vector<1x8x32xf32>
    tpu.vector_store %arg15[%c0_57, %c0_58, %c0_59], %154 {strides = array<i32>} : memref<1x8x32xf32, #tpu.memory_space<vmem>>, vector<1x8x32xf32>,
    %c1_i32 = arith.constant 1 : i32
    %155 = arith.cmpi eq, %arg1, %c1_i32 : i32
    %156 = arith.extui %155 : i1 to i32
    %c0_i32_60 = arith.constant 0 : i32
    %157 = arith.cmpi ne, %156, %c0_i32_60 : i32
    scf.if %157 {
      %c0_61 = arith.constant 0 : index
      %c0_62 = arith.constant 0 : index
      %c0_63 = arith.constant 0 : index
      %158 = vector.load %arg14[%c0_61, %c0_62, %c0_63] : memref<1x8x32xf32, #tpu.memory_space<vmem>>, vector<1x8x32xf32>
      %159 = vector.shape_cast %158 : vector<1x8x32xf32> to vector<8x32xf32>
      %160 = vector.shape_cast %151 : vector<8x32xf32> to vector<1x8x32xf32>
      tpu.vector_store %arg14[%c0_61, %c0_62, %c0_63], %160 {strides = array<i32>} : memref<1x8x32xf32, #tpu.memory_space<vmem>>, vector<1x8x32xf32>,
    } else {
    }
    return
  }
  func.func @transform_0(%arg0: i32, %arg1: i32) -> (i32, i32, i32) {
    %c0_i32 = arith.constant 0 : i32
    %c0_i32_0 = arith.constant 0 : i32
    %c0_i32_1 = arith.constant 0 : i32
    return %arg0, %c0_i32, %c0_i32_0 : i32, i32, i32
  }
  func.func @transform_1(%arg0: i32, %arg1: i32) -> (i32, i32, i32) {
    %c0_i32 = arith.constant 0 : i32
    %c0_i32_0 = arith.constant 0 : i32
    %c0_i32_1 = arith.constant 0 : i32
    return %arg1, %c0_i32, %c0_i32_0 : i32, i32, i32
  }
  func.func @transform_2(%arg0: i32, %arg1: i32) -> (i32, i32, i32) {
    %c0_i32 = arith.constant 0 : i32
    %c0_i32_0 = arith.constant 0 : i32
    %c0_i32_1 = arith.constant 0 : i32
    return %arg1, %c0_i32, %c0_i32_0 : i32, i32, i32
  }
  func.func @transform_3(%arg0: i32, %arg1: i32) -> (i32, i32, i32) {
    %c0_i32 = arith.constant 0 : i32
    %c0_i32_0 = arith.constant 0 : i32
    %c0_i32_1 = arith.constant 0 : i32
    return %arg1, %c0_i32, %c0_i32_0 : i32, i32, i32
  }
  func.func @transform_4(%arg0: i32, %arg1: i32) -> (i32, i32, i32) {
    %c0_i32 = arith.constant 0 : i32
    %c0_i32_0 = arith.constant 0 : i32
    %c0_i32_1 = arith.constant 0 : i32
    return %arg1, %c0_i32, %c0_i32_0 : i32, i32, i32
  }
  func.func @transform_5(%arg0: i32, %arg1: i32) -> (i32, i32, i32) {
    %c0_i32 = arith.constant 0 : i32
    %c0_i32_0 = arith.constant 0 : i32
    %c0_i32_1 = arith.constant 0 : i32
    return %arg1, %c0_i32, %c0_i32_0 : i32, i32, i32
  }
  func.func @transform_6(%arg0: i32, %arg1: i32) -> (i32, i32, i32) {
    %c0_i32 = arith.constant 0 : i32
    %c0_i32_0 = arith.constant 0 : i32
    %c0_i32_1 = arith.constant 0 : i32
    return %arg1, %c0_i32, %c0_i32_0 : i32, i32, i32
  }
  func.func @transform_7(%arg0: i32, %arg1: i32) -> (i32, i32, i32) {
    %c0_i32 = arith.constant 0 : i32
    %c0_i32_0 = arith.constant 0 : i32
    %c0_i32_1 = arith.constant 0 : i32
    return %arg1, %c0_i32, %c0_i32_0 : i32, i32, i32
  }
  func.func @transform_8(%arg0: i32, %arg1: i32) -> (i32, i32, i32) {
    %c0_i32 = arith.constant 0 : i32
    %c0_i32_0 = arith.constant 0 : i32
    %c0_i32_1 = arith.constant 0 : i32
    return %arg1, %c0_i32, %c0_i32_0 : i32, i32, i32
  }
  func.func @transform_9(%arg0: i32, %arg1: i32) -> (i32, i32, i32) {
    %c0_i32 = arith.constant 0 : i32
    %c0_i32_0 = arith.constant 0 : i32
    %c0_i32_1 = arith.constant 0 : i32
    return %arg1, %c0_i32, %c0_i32_0 : i32, i32, i32
  }
  func.func @transform_10(%arg0: i32, %arg1: i32) -> (i32, i32, i32) {
    %c0_i32 = arith.constant 0 : i32
    %c0_i32_0 = arith.constant 0 : i32
    %c0_i32_1 = arith.constant 0 : i32
    return %arg1, %c0_i32, %c0_i32_0 : i32, i32, i32
  }
  func.func @transform_11(%arg0: i32, %arg1: i32) -> (i32, i32, i32) {
    %c0_i32 = arith.constant 0 : i32
    %c0_i32_0 = arith.constant 0 : i32
    %c0_i32_1 = arith.constant 0 : i32
    return %arg1, %c0_i32, %c0_i32_0 : i32, i32, i32
  }
  func.func @transform_12(%arg0: i32, %arg1: i32) -> (i32, i32, i32) {
    %c0_i32 = arith.constant 0 : i32
    %c0_i32_0 = arith.constant 0 : i32
    %c0_i32_1 = arith.constant 0 : i32
    return %arg0, %c0_i32, %c0_i32_0 : i32, i32, i32
  }
}

</mosaic_0001>

<llo_original>
// kernel: tpu_custom_call.1
$region0: #{tpu_custom_call.1}
  #allocation0 [shape = 'u32[]', space=smem, size = 0x4, offset = 0x4, fixed_abs, tag = 'smem constant byte address 0x4 - core index']
  #allocation1 [shape = 'u32[144,128]{1,0:T(1,128)}', space=vmem, size = 0x12000, scoped, tag = 'internal scratch']
  #allocation2 [shape = 'f32[1,8,32]{2,1,0:T(8,128)}', space=vmem, size = 0x1000, scoped, tag = 'scratch operand']
  %s0 = inlined_call_operand.hbm [shape: f32[2,8,32], index: 0, kind: input, shape index: {}]
  %s1 = inlined_call_operand.hbm [shape: f32[2,1,32], index: 1, kind: input, shape index: {}]
  %s2 = inlined_call_operand.hbm [shape: f32[2,1,32], index: 2, kind: input, shape index: {}]
  %s3 = inlined_call_operand.hbm [shape: bf16[2,32,96], index: 3, kind: input, shape index: {}]
  %s4 = inlined_call_operand.hbm [shape: bf16[2,32,32], index: 4, kind: input, shape index: {}]
  %s5 = inlined_call_operand.hbm [shape: f32[2,1,32], index: 5, kind: input, shape index: {}]
  %s6 = inlined_call_operand.hbm [shape: f32[2,1,32], index: 6, kind: input, shape index: {}]
  %s7 = inlined_call_operand.hbm [shape: f32[2,1,32], index: 7, kind: input, shape index: {}]
  %s8 = inlined_call_operand.hbm [shape: bf16[2,32,64], index: 8, kind: input, shape index: {}]
  %s9 = inlined_call_operand.hbm [shape: f32[2,1,64], index: 9, kind: input, shape index: {}]
  %s10 = inlined_call_operand.hbm [shape: bf16[2,64,32], index: 10, kind: input, shape index: {}]
  %s11 = inlined_call_operand.hbm [shape: f32[2,1,32], index: 11, kind: input, shape index: {}]
  %s12 = inlined_call_operand.hbm [shape: f32[2,8,32], index: 12, kind: output, shape index: {}]
  %s13 = sld [smem:[#allocation0]]
  $region137: #{tpu_custom_call.1} parent=0
    _
  %s15 = ssub.s32 1, %s13
  %s16 = scalar_select 0, %s15, %s13
  $region1: #{tpu_custom_call.1} parent=0
    #allocation3 [shape = 'u8[8192]{0}', space=vmem, size = 0x2000, scoped, tag = 'input window, operand 0']
    #allocation4 [shape = 's32[2]{0}', space=sflag, size = 0x8, scoped, tag = 'scoped memory for tpu_custom_call.1']
    #allocation5 [shape = 's32[2]{0}', space=sflag, size = 0x8, scoped, tag = 'scoped memory for tpu_custom_call.1']
    #allocation6 [shape = 'u8[1024]{0}', space=vmem, size = 0x400, scoped, tag = 'input window, operand 1']
    #allocation7 [shape = 's32[2]{0}', space=sflag, size = 0x8, scoped, tag = 'scoped memory for tpu_custom_call.1']
    #allocation8 [shape = 'u8[1024]{0}', space=vmem, size = 0x400, scoped, tag = 'input window, operand 2']
    #allocation9 [shape = 'u8[16384]{0}', space=vmem, size = 0x4000, scoped, tag = 'input window, operand 3']
    #allocation10 [shape = 's32[2]{0}', space=sflag, size = 0x8, scoped, tag = 'scoped memory for tpu_custom_call.1']
    #allocation11 [shape = 'u8[16384]{0}', space=vmem, size = 0x4000, scoped, tag = 'input window, operand 4']
    #allocation12 [shape = 'u8[1024]{0}', space=vmem, size = 0x400, scoped, tag = 'input window, operand 5']
    #allocation13 [shape = 's32[2]{0}', space=sflag, size = 0x8, scoped, tag = 'scoped memory for tpu_custom_call.1']
    #allocation14 [shape = 'u8[1024]{0}', space=vmem, size = 0x400, scoped, tag = 'input window, operand 6']
    #allocation15 [shape = 'u8[1024]{0}', space=vmem, size = 0x400, scoped, tag = 'input window, operand 7']
    #allocation16 [shape = 's32[2]{0}', space=sflag, size = 0x8, scoped, tag = 'scoped memory for tpu_custom_call.1']
    #allocation17 [shape = 'u8[16384]{0}', space=vmem, size = 0x4000, scoped, tag = 'input window, operand 8']
    #allocation18 [shape = 'u8[1024]{0}', space=vmem, size = 0x400, scoped, tag = 'input window, operand 9']
    #allocation19 [shape = 's32[2]{0}', space=sflag, size = 0x8, scoped, tag = 'scoped memory for tpu_custom_call.1']
    #allocation20 [shape = 'u8[32768]{0}', space=vmem, size = 0x8000, scoped, tag = 'input window, operand 10']
    #allocation21 [shape = 'u8[1024]{0}', space=vmem, size = 0x400, scoped, tag = 'input window, operand 11']
    #allocation22 [shape = 's32[2]{0}', space=sflag, size = 0x8, scoped, tag = 'scoped memory for tpu_custom_call.1']
    #allocation23 [shape = 'u8[8192]{0}', space=vmem, size = 0x2000, scoped, tag = 'output window, operand 0']
    %17 = vsyncpa [#allocation4], 0
    %s18 = scalar_lea.sflag [#allocation4], 1
    %19 = vsyncpa %s18, 0
    %20 = vsyncpa [#allocation7], 0
    %s21 = scalar_lea.sflag [#allocation7], 1
    %22 = vsyncpa %s21, 0
    %23 = vsyncpa [#allocation10], 0
    %s24 = scalar_lea.sflag [#allocation10], 1
    %25 = vsyncpa %s24, 0
    %26 = vsyncpa [#allocation13], 0
    %s27 = scalar_lea.sflag [#allocation13], 1
    %28 = vsyncpa %s27, 0
    %29 = vsyncpa [#allocation16], 0
    %s30 = scalar_lea.sflag [#allocation16], 1
    %31 = vsyncpa %s30, 0
    %32 = vsyncpa [#allocation19], 0
    %s33 = scalar_lea.sflag [#allocation19], 1
    %34 = vsyncpa %s33, 0
    %35 = vsyncpa [#allocation22], 0
    %s36 = scalar_lea.sflag [#allocation22], 1
    %37 = vsyncpa %s36, 0
    %38 = vsyncpa [#allocation5], 0
    %s39 = scalar_lea.sflag [#allocation5], 1
    %40 = vsyncpa %s39, 0
    loop: start=0, step=1, limit=6
    $region2: #{tpu_custom_call.1} parent=1 // loop_pre_header
      _
    $region3: #{tpu_custom_call.1} parent=1 // loop_header
      %s42 = sphi 0, %s46
      %p43 = scmp.ge.s32.totalorder %s42, 6
      %s49 = sphi 0, %s61
      %s50 = sphi 0, %s57
      %s51 = sphi 0, %s49
      %s52 = sphi 0, %s50
      %s53 = sphi 0, %s51
      %s54 = sphi 0, %s52
      %s64 = sphi 0, %s66
      %s67 = sphi 0, %s64
      %s68 = sphi 0, %s67
      %s84 = sphi 0, %s68
      %s90 = sphi 0, %s92
      %s93 = sphi 0, %s90
      %s94 = sphi 0, %s93
      %s110 = sphi 0, %s94
      %s116 = sphi 0, %s118
      %s119 = sphi 0, %s116
      %s120 = sphi 0, %s119
      %s136 = sphi 0, %s120
      %s142 = sphi 0, %s144
      %s145 = sphi 0, %s142
      %s146 = sphi 0, %s145
      %s162 = sphi 0, %s146
      %s168 = sphi 0, %s170
      %s171 = sphi 0, %s168
      %s172 = sphi 0, %s171
      %s188 = sphi 0, %s172
      %s194 = sphi 0, %s196
      %s197 = sphi 0, %s194
      %s198 = sphi 0, %s197
      %s214 = sphi 0, %s198
      %s220 = sphi 0, %s222
      %s223 = sphi 0, %s220
      %s224 = sphi 0, %s223
      %s240 = sphi 0, %s224
      %s246 = sphi 0, %s248
      %s249 = sphi 0, %s246
      %s250 = sphi 0, %s249
      %s266 = sphi 0, %s250
      %s272 = sphi 0, %s274
      %s275 = sphi 0, %s272
      %s276 = sphi 0, %s275
      %s292 = sphi 0, %s276
      %s298 = sphi 0, %s300
      %s301 = sphi 0, %s298
      %s302 = sphi 0, %s301
      %s318 = sphi 0, %s302
      %s324 = sphi 0, %s326
      %s327 = sphi 0, %s324
      %s328 = sphi 0, %s327
      %s344 = sphi 0, %s328
      %s350 = sphi 0, %s352
      %s353 = sphi 0, %s350
      %s354 = sphi 0, %s353
      %s370 = sphi 0, %s354
      %s376 = sphi 0, %s378
      %s379 = sphi 0, %s376
      %s380 = sphi 0, %s379
      %s396 = sphi 0, %s380
    $region4: #{tpu_custom_call.1} parent=1 // loop_header_branch
      %45 = sbr.rel (%p43) target = $region8
    $region5: #{tpu_custom_call.1} parent=1 // loop_body
      %s47 = ssub.s32 %s42, 1
      %s48 = ssub.s32 %s42, 2
      %s55 = sadd.s32 1, %s50
      %p56 = scmp.ge.s32.totalorder %s55, 2
      %s57 = scalar_select %p56, 0, %s55
      %s58 = sadd.s32 1, %s49
      %s59 = scalar_select %p56, %s58, %s49
      %p60 = scmp.ge.s32.totalorder %s59, 2
      %s61 = scalar_select %p60, 0, %s59
      %s62 = ssub.s32 %s49, %s61
      %p63 = scmp.eq.s32.totalorder %s62, 0
      %s65 = sadd.s32 %s64, 1
      %s66 = scalar_select %p63, %s64, %s65
      %p69 = pneg %p63
      %p70 = scmp.eq.s32.totalorder %s42, 3
      %p71 = por %p69, %p70
      %p72 = scmp.ne.s32.totalorder %s64, %s67
      %p73 = scmp.eq.s32.totalorder %s42, 0
      %p74 = por %p72, %p73
      %p75 = scmp.ne.s32.totalorder %s64, %s67
      %p76 = scmp.eq.s32.totalorder %s47, 3
      %p77 = por %p75, %p76
      %p78 = scmp.ne.s32.totalorder %s67, %s68
      %p79 = scmp.eq.s32.totalorder %s47, 0
      %p80 = por %p78, %p79
      %p81 = scmp.ne.s32.totalorder %s67, %s68
      %p82 = scmp.eq.s32.totalorder %s48, 3
      %p83 = por %p81, %p82
      %p85 = scmp.ne.s32.totalorder %s68, %s84
      %p86 = scmp.eq.s32.totalorder %s48, 0
      %p87 = por %p85, %p86
      %s88 = ssub.s32 %s50, %s57
      %p89 = scmp.eq.s32.totalorder %s88, 0
      %s91 = sadd.s32 %s90, 1
      %s92 = scalar_select %p89, %s90, %s91
      %p95 = pneg %p89
      %p96 = scmp.eq.s32.totalorder %s42, 3
      %p97 = por %p95, %p96
      %p98 = scmp.ne.s32.totalorder %s90, %s93
      %p99 = scmp.eq.s32.totalorder %s42, 0
      %p100 = por %p98, %p99
      %p101 = scmp.ne.s32.totalorder %s90, %s93
      %p102 = scmp.eq.s32.totalorder %s47, 3
      %p103 = por %p101, %p102
      %p104 = scmp.ne.s32.totalorder %s93, %s94
      %p105 = scmp.eq.s32.totalorder %s47, 0
      %p106 = por %p104, %p105
      %p107 = scmp.ne.s32.totalorder %s93, %s94
      %p108 = scmp.eq.s32.totalorder %s48, 3
      %p109 = por %p107, %p108
      %p111 = scmp.ne.s32.totalorder %s94, %s110
      %p112 = scmp.eq.s32.totalorder %s48, 0
      %p113 = por %p111, %p112
      %s114 = ssub.s32 %s50, %s57
      %p115 = scmp.eq.s32.totalorder %s114, 0
      %s117 = sadd.s32 %s116, 1
      %s118 = scalar_select %p115, %s116, %s117
      %p121 = pneg %p115
      %p122 = scmp.eq.s32.totalorder %s42, 3
      %p123 = por %p121, %p122
      %p124 = scmp.ne.s32.totalorder %s116, %s119
      %p125 = scmp.eq.s32.totalorder %s42, 0
      %p126 = por %p124, %p125
      %p127 = scmp.ne.s32.totalorder %s116, %s119
      %p128 = scmp.eq.s32.totalorder %s47, 3
      %p129 = por %p127, %p128
      %p130 = scmp.ne.s32.totalorder %s119, %s120
      %p131 = scmp.eq.s32.totalorder %s47, 0
      %p132 = por %p130, %p131
      %p133 = scmp.ne.s32.totalorder %s119, %s120
      %p134 = scmp.eq.s32.totalorder %s48, 3
      %p135 = por %p133, %p134
      %p137 = scmp.ne.s32.totalorder %s120, %s136
      %p138 = scmp.eq.s32.totalorder %s48, 0
      %p139 = por %p137, %p138
      %s140 = ssub.s32 %s50, %s57
      %p141 = scmp.eq.s32.totalorder %s140, 0
      %s143 = sadd.s32 %s142, 1
      %s144 = scalar_select %p141, %s142, %s143
      %p147 = pneg %p141
      %p148 = scmp.eq.s32.totalorder %s42, 3
      %p149 = por %p147, %p148
      %p150 = scmp.ne.s32.totalorder %s142, %s145
      %p151 = scmp.eq.s32.totalorder %s42, 0
      %p152 = por %p150, %p151
      %p153 = scmp.ne.s32.totalorder %s142, %s145
      %p154 = scmp.eq.s32.totalorder %s47, 3
      %p155 = por %p153, %p154
      %p156 = scmp.ne.s32.totalorder %s145, %s146
      %p157 = scmp.eq.s32.totalorder %s47, 0
      %p158 = por %p156, %p157
      %p159 = scmp.ne.s32.totalorder %s145, %s146
      %p160 = scmp.eq.s32.totalorder %s48, 3
      %p161 = por %p159, %p160
      %p163 = scmp.ne.s32.totalorder %s146, %s162
      %p164 = scmp.eq.s32.totalorder %s48, 0
      %p165 = por %p163, %p164
      %s166 = ssub.s32 %s50, %s57
      %p167 = scmp.eq.s32.totalorder %s166, 0
      %s169 = sadd.s32 %s168, 1
      %s170 = scalar_select %p167, %s168, %s169
      %p173 = pneg %p167
      %p174 = scmp.eq.s32.totalorder %s42, 3
      %p175 = por %p173, %p174
      %p176 = scmp.ne.s32.totalorder %s168, %s171
      %p177 = scmp.eq.s32.totalorder %s42, 0
      %p178 = por %p176, %p177
      %p179 = scmp.ne.s32.totalorder %s168, %s171
      %p180 = scmp.eq.s32.totalorder %s47, 3
      %p181 = por %p179, %p180
      %p182 = scmp.ne.s32.totalorder %s171, %s172
      %p183 = scmp.eq.s32.totalorder %s47, 0
      %p184 = por %p182, %p183
      %p185 = scmp.ne.s32.totalorder %s171, %s172
      %p186 = scmp.eq.s32.totalorder %s48, 3
      %p187 = por %p185, %p186
      %p189 = scmp.ne.s32.totalorder %s172, %s188
      %p190 = scmp.eq.s32.totalorder %s48, 0
      %p191 = por %p189, %p190
      %s192 = ssub.s32 %s50, %s57
      %p193 = scmp.eq.s32.totalorder %s192, 0
      %s195 = sadd.s32 %s194, 1
      %s196 = scalar_select %p193, %s194, %s195
      %p199 = pneg %p193
      %p200 = scmp.eq.s32.totalorder %s42, 3
      %p201 = por %p199, %p200
      %p202 = scmp.ne.s32.totalorder %s194, %s197
      %p203 = scmp.eq.s32.totalorder %s42, 0
      %p204 = por %p202, %p203
      %p205 = scmp.ne.s32.totalorder %s194, %s197
      %p206 = scmp.eq.s32.totalorder %s47, 3
      %p207 = por %p205, %p206
      %p208 = scmp.ne.s32.totalorder %s197, %s198
      %p209 = scmp.eq.s32.totalorder %s47, 0
      %p210 = por %p208, %p209
      %p211 = scmp.ne.s32.totalorder %s197, %s198
      %p212 = scmp.eq.s32.totalorder %s48, 3
      %p213 = por %p211, %p212
      %p215 = scmp.ne.s32.totalorder %s198, %s214
      %p216 = scmp.eq.s32.totalorder %s48, 0
      %p217 = por %p215, %p216
      %s218 = ssub.s32 %s50, %s57
      %p219 = scmp.eq.s32.totalorder %s218, 0
      %s221 = sadd.s32 %s220, 1
      %s222 = scalar_select %p219, %s220, %s221
      %p225 = pneg %p219
      %p226 = scmp.eq.s32.totalorder %s42, 3
      %p227 = por %p225, %p226
      %p228 = scmp.ne.s32.totalorder %s220, %s223
      %p229 = scmp.eq.s32.totalorder %s42, 0
      %p230 = por %p228, %p229
      %p231 = scmp.ne.s32.totalorder %s220, %s223
      %p232 = scmp.eq.s32.totalorder %s47, 3
      %p233 = por %p231, %p232
      %p234 = scmp.ne.s32.totalorder %s223, %s224
      %p235 = scmp.eq.s32.totalorder %s47, 0
      %p236 = por %p234, %p235
      %p237 = scmp.ne.s32.totalorder %s223, %s224
      %p238 = scmp.eq.s32.totalorder %s48, 3
      %p239 = por %p237, %p238
      %p241 = scmp.ne.s32.totalorder %s224, %s240
      %p242 = scmp.eq.s32.totalorder %s48, 0
      %p243 = por %p241, %p242
      %s244 = ssub.s32 %s50, %s57
      %p245 = scmp.eq.s32.totalorder %s244, 0
      %s247 = sadd.s32 %s246, 1
      %s248 = scalar_select %p245, %s246, %s247
      %p251 = pneg %p245
      %p252 = scmp.eq.s32.totalorder %s42, 3
      %p253 = por %p251, %p252
      %p254 = scmp.ne.s32.totalorder %s246, %s249
      %p255 = scmp.eq.s32.totalorder %s42, 0
      %p256 = por %p254, %p255
      %p257 = scmp.ne.s32.totalorder %s246, %s249
      %p258 = scmp.eq.s32.totalorder %s47, 3
      %p259 = por %p257, %p258
      %p260 = scmp.ne.s32.totalorder %s249, %s250
      %p261 = scmp.eq.s32.totalorder %s47, 0
      %p262 = por %p260, %p261
      %p263 = scmp.ne.s32.totalorder %s249, %s250
      %p264 = scmp.eq.s32.totalorder %s48, 3
      %p265 = por %p263, %p264
      %p267 = scmp.ne.s32.totalorder %s250, %s266
      %p268 = scmp.eq.s32.totalorder %s48, 0
      %p269 = por %p267, %p268
      %s270 = ssub.s32 %s50, %s57
      %p271 = scmp.eq.s32.totalorder %s270, 0
      %s273 = sadd.s32 %s272, 1
      %s274 = scalar_select %p271, %s272, %s273
      %p277 = pneg %p271
      %p278 = scmp.eq.s32.totalorder %s42, 3
      %p279 = por %p277, %p278
      %p280 = scmp.ne.s32.totalorder %s272, %s275
      %p281 = scmp.eq.s32.totalorder %s42, 0
      %p282 = por %p280, %p281
      %p283 = scmp.ne.s32.totalorder %s272, %s275
      %p284 = scmp.eq.s32.totalorder %s47, 3
      %p285 = por %p283, %p284
      %p286 = scmp.ne.s32.totalorder %s275, %s276
      %p287 = scmp.eq.s32.totalorder %s47, 0
      %p288 = por %p286, %p287
      %p289 = scmp.ne.s32.totalorder %s275, %s276
      %p290 = scmp.eq.s32.totalorder %s48, 3
      %p291 = por %p289, %p290
      %p293 = scmp.ne.s32.totalorder %s276, %s292
      %p294 = scmp.eq.s32.totalorder %s48, 0
      %p295 = por %p293, %p294
      %s296 = ssub.s32 %s50, %s57
      %p297 = scmp.eq.s32.totalorder %s296, 0
      %s299 = sadd.s32 %s298, 1
      %s300 = scalar_select %p297, %s298, %s299
      %p303 = pneg %p297
      %p304 = scmp.eq.s32.totalorder %s42, 3
      %p305 = por %p303, %p304
      %p306 = scmp.ne.s32.totalorder %s298, %s301
      %p307 = scmp.eq.s32.totalorder %s42, 0
      %p308 = por %p306, %p307
      %p309 = scmp.ne.s32.totalorder %s298, %s301
      %p310 = scmp.eq.s32.totalorder %s47, 3
      %p311 = por %p309, %p310
      %p312 = scmp.ne.s32.totalorder %s301, %s302
      %p313 = scmp.eq.s32.totalorder %s47, 0
      %p314 = por %p312, %p313
      %p315 = scmp.ne.s32.totalorder %s301, %s302
      %p316 = scmp.eq.s32.totalorder %s48, 3
      %p317 = por %p315, %p316
      %p319 = scmp.ne.s32.totalorder %s302, %s318
      %p320 = scmp.eq.s32.totalorder %s48, 0
      %p321 = por %p319, %p320
      %s322 = ssub.s32 %s50, %s57
      %p323 = scmp.eq.s32.totalorder %s322, 0
      %s325 = sadd.s32 %s324, 1
      %s326 = scalar_select %p323, %s324, %s325
      %p329 = pneg %p323
      %p330 = scmp.eq.s32.totalorder %s42, 3
      %p331 = por %p329, %p330
      %p332 = scmp.ne.s32.totalorder %s324, %s327
      %p333 = scmp.eq.s32.totalorder %s42, 0
      %p334 = por %p332, %p333
      %p335 = scmp.ne.s32.totalorder %s324, %s327
      %p336 = scmp.eq.s32.totalorder %s47, 3
      %p337 = por %p335, %p336
      %p338 = scmp.ne.s32.totalorder %s327, %s328
      %p339 = scmp.eq.s32.totalorder %s47, 0
      %p340 = por %p338, %p339
      %p341 = scmp.ne.s32.totalorder %s327, %s328
      %p342 = scmp.eq.s32.totalorder %s48, 3
      %p343 = por %p341, %p342
      %p345 = scmp.ne.s32.totalorder %s328, %s344
      %p346 = scmp.eq.s32.totalorder %s48, 0
      %p347 = por %p345, %p346
      %s348 = ssub.s32 %s50, %s57
      %p349 = scmp.eq.s32.totalorder %s348, 0
      %s351 = sadd.s32 %s350, 1
      %s352 = scalar_select %p349, %s350, %s351
      %p355 = pneg %p349
      %p356 = scmp.eq.s32.totalorder %s42, 3
      %p357 = por %p355, %p356
      %p358 = scmp.ne.s32.totalorder %s350, %s353
      %p359 = scmp.eq.s32.totalorder %s42, 0
      %p360 = por %p358, %p359
      %p361 = scmp.ne.s32.totalorder %s350, %s353
      %p362 = scmp.eq.s32.totalorder %s47, 3
      %p363 = por %p361, %p362
      %p364 = scmp.ne.s32.totalorder %s353, %s354
      %p365 = scmp.eq.s32.totalorder %s47, 0
      %p366 = por %p364, %p365
      %p367 = scmp.ne.s32.totalorder %s353, %s354
      %p368 = scmp.eq.s32.totalorder %s48, 3
      %p369 = por %p367, %p368
      %p371 = scmp.ne.s32.totalorder %s354, %s370
      %p372 = scmp.eq.s32.totalorder %s48, 0
      %p373 = por %p371, %p372
      %s374 = ssub.s32 %s49, %s61
      %p375 = scmp.eq.s32.totalorder %s374, 0
      %s377 = sadd.s32 %s376, 1
      %s378 = scalar_select %p375, %s376, %s377
      %p381 = pneg %p375
      %p382 = scmp.eq.s32.totalorder %s42, 3
      %p383 = por %p381, %p382
      %p384 = scmp.ne.s32.totalorder %s376, %s379
      %p385 = scmp.eq.s32.totalorder %s42, 0
      %p386 = por %p384, %p385
      %p387 = scmp.ne.s32.totalorder %s376, %s379
      %p388 = scmp.eq.s32.totalorder %s47, 3
      %p389 = por %p387, %p388
      %p390 = scmp.ne.s32.totalorder %s379, %s380
      %p391 = scmp.eq.s32.totalorder %s47, 0
      %p392 = por %p390, %p391
      %p393 = scmp.ne.s32.totalorder %s379, %s380
      %p394 = scmp.eq.s32.totalorder %s48, 3
      %p395 = por %p393, %p394
      %p397 = scmp.ne.s32.totalorder %s380, %s396
      %p398 = scmp.eq.s32.totalorder %s48, 0
      %p399 = por %p397, %p398
      %p400 = scmp.le.s32.totalorder 1, %s42
      %p401 = scmp.lt.s32.totalorder %s42, 5
      %p402 = pnand %p400, %p401
      %p403 = pneg %p402
      // Predicated region
      $region9: #{tpu_custom_call.1} parent=5 // pred_check
        _
      $region10: #{tpu_custom_call.1} parent=5 // pred_check_branch
        %405 = sbr.rel (%p402) target = $region12
      $region11: #{tpu_custom_call.1} parent=5 // pred_region
        %s406 = ssub.s32 %s42, 1
      $region12: #{tpu_custom_call.1} parent=5 // pred_fallthru
        _
      %p407 = scmp.lt.s32.totalorder %s42, 4
      // Predicated region
      $region13: #{tpu_custom_call.1} parent=5 // pred_check
        %p408 = pneg %p407
      $region14: #{tpu_custom_call.1} parent=5 // pred_check_branch
        %410 = sbr.rel (%p408) target = $region16
      $region15: #{tpu_custom_call.1} parent=5 // pred_region
        // Predicated region
        $region17: #{tpu_custom_call.1} parent=15 // pred_check
          %p411 = pneg %p74
        $region18: #{tpu_custom_call.1} parent=15 // pred_check_branch
          %413 = sbr.rel (%p411) target = $region20
        $region19: #{tpu_custom_call.1} parent=15 // pred_region
          %s414 = sand.u32 %s64, 1
          %s415 = scalar_lea.sflag [#allocation4], %s414
          %s416 = sand.u32 %s64, 1
          %s417 = smul.addr %s416, 8
          %s418 = scalar_lea.vmem [#allocation3], %s417
          %s420 = ssub.s32 128, 128
          %421 = vsyncadd %s415, %s420
          %s422 = smul.addr %s49, 128
          %s423 = scalar_lea.hbm %s0, %s422
          %s425 = sshll.u32 %s418, 4
          %s426 = int_to_ptr.vmem [resolvable:$true] %s425
          %428 = dma.hbm_to_vmem [thread:$0]  %s423, 128, %s426, %s415
        $region20: #{tpu_custom_call.1} parent=15 // pred_fallthru
          _
        // Predicated region
        $region21: #{tpu_custom_call.1} parent=15 // pred_check
          %p429 = pneg %p100
        $region22: #{tpu_custom_call.1} parent=15 // pred_check_branch
          %431 = sbr.rel (%p429) target = $region24
        $region23: #{tpu_custom_call.1} parent=15 // pred_region
          %s432 = sand.u32 %s42, 1
          %s433 = scalar_lea.sflag [#allocation7], %s432
          %s434 = sand.u32 %s90, 1
          %s435 = scalar_lea.vmem [#allocation6], %s434
          %s437 = ssub.s32 16, 16
          %438 = vsyncadd %s433, %s437
          %s439 = smul.addr %s50, 16
          %s440 = scalar_lea.hbm %s1, %s439
          %s442 = sshll.u32 %s435, 4
          %s443 = int_to_ptr.vmem [resolvable:$true] %s442
          %445 = dma.hbm_to_vmem [thread:$0]  %s440, 16, %s443, %s433
        $region24: #{tpu_custom_call.1} parent=15 // pred_fallthru
          _
        // Predicated region
        $region25: #{tpu_custom_call.1} parent=15 // pred_check
          %p446 = pneg %p126
        $region26: #{tpu_custom_call.1} parent=15 // pred_check_branch
          %448 = sbr.rel (%p446) target = $region28
        $region27: #{tpu_custom_call.1} parent=15 // pred_region
          %s449 = sand.u32 %s42, 1
          %s450 = scalar_lea.sflag [#allocation7], %s449
          %s451 = sand.u32 %s116, 1
          %s452 = scalar_lea.vmem [#allocation8], %s451
          %s454 = ssub.s32 16, 16
          %455 = vsyncadd %s450, %s454
          %s456 = smul.addr %s50, 16
          %s457 = scalar_lea.hbm %s2, %s456
          %s459 = sshll.u32 %s452, 4
          %s460 = int_to_ptr.vmem [resolvable:$true] %s459
          %462 = dma.hbm_to_vmem [thread:$0]  %s457, 16, %s460, %s450
        $region28: #{tpu_custom_call.1} parent=15 // pred_fallthru
          _
        // Predicated region
        $region29: #{tpu_custom_call.1} parent=15 // pred_check
          %p463 = pneg %p152
        $region30: #{tpu_custom_call.1} parent=15 // pred_check_branch
          %465 = sbr.rel (%p463) target = $region32
        $region31: #{tpu_custom_call.1} parent=15 // pred_region
          %s466 = sand.u32 %s42, 1
          %s467 = scalar_lea.sflag [#allocation10], %s466
          %s468 = sand.u32 %s142, 1
          %s469 = smul.addr %s468, 16
          %s470 = scalar_lea.vmem [#allocation9], %s469
          %s472 = ssub.s32 256, 256
          %473 = vsyncadd %s467, %s472
          %s474 = smul.addr %s50, 4
          %s475 = smul.addr %s474, 64
          %s476 = scalar_lea.hbm %s3, %s475
          %s477 = sshll.u32 %s470, 4
          %s478 = int_to_ptr.vmem [resolvable:$true] %s477
          %483 = dma.hbm_to_vmem [thread:$0]  %s476, 256, %s478, %s467, 64, 64, 4
        $region32: #{tpu_custom_call.1} parent=15 // pred_fallthru
          _
        // Predicated region
        $region33: #{tpu_custom_call.1} parent=15 // pred_check
          %p484 = pneg %p178
        $region34: #{tpu_custom_call.1} parent=15 // pred_check_branch
          %486 = sbr.rel (%p484) target = $region36
        $region35: #{tpu_custom_call.1} parent=15 // pred_region
          %s487 = sand.u32 %s42, 1
          %s488 = scalar_lea.sflag [#allocation10], %s487
          %s489 = sand.u32 %s168, 1
          %s490 = smul.addr %s489, 16
          %s491 = scalar_lea.vmem [#allocation11], %s490
          %s493 = ssub.s32 256, 256
          %494 = vsyncadd %s488, %s493
          %s495 = smul.addr %s50, 4
          %s496 = smul.addr %s495, 64
          %s497 = scalar_lea.hbm %s4, %s496
          %s498 = sshll.u32 %s491, 4
          %s499 = int_to_ptr.vmem [resolvable:$true] %s498
          %504 = dma.hbm_to_vmem [thread:$0]  %s497, 256, %s499, %s488, 64, 64, 4
        $region36: #{tpu_custom_call.1} parent=15 // pred_fallthru
          _
        // Predicated region
        $region37: #{tpu_custom_call.1} parent=15 // pred_check
          %p505 = pneg %p204
        $region38: #{tpu_custom_call.1} parent=15 // pred_check_branch
          %507 = sbr.rel (%p505) target = $region40
        $region39: #{tpu_custom_call.1} parent=15 // pred_region
          %s508 = sand.u32 %s42, 1
          %s509 = scalar_lea.sflag [#allocation13], %s508
          %s510 = sand.u32 %s194, 1
          %s511 = scalar_lea.vmem [#allocation12], %s510
          %s513 = ssub.s32 16, 16
          %514 = vsyncadd %s509, %s513
          %s515 = smul.addr %s50, 16
          %s516 = scalar_lea.hbm %s5, %s515
          %s518 = sshll.u32 %s511, 4
          %s519 = int_to_ptr.vmem [resolvable:$true] %s518
          %521 = dma.hbm_to_vmem [thread:$0]  %s516, 16, %s519, %s509
        $region40: #{tpu_custom_call.1} parent=15 // pred_fallthru
          _
        // Predicated region
        $region41: #{tpu_custom_call.1} parent=15 // pred_check
          %p522 = pneg %p230
        $region42: #{tpu_custom_call.1} parent=15 // pred_check_branch
          %524 = sbr.rel (%p522) target = $region44
        $region43: #{tpu_custom_call.1} parent=15 // pred_region
          %s525 = sand.u32 %s42, 1
          %s526 = scalar_lea.sflag [#allocation13], %s525
          %s527 = sand.u32 %s220, 1
          %s528 = scalar_lea.vmem [#allocation14], %s527
          %s530 = ssub.s32 16, 16
          %531 = vsyncadd %s526, %s530
          %s532 = smul.addr %s50, 16
          %s533 = scalar_lea.hbm %s6, %s532
          %s535 = sshll.u32 %s528, 4
          %s536 = int_to_ptr.vmem [resolvable:$true] %s535
          %538 = dma.hbm_to_vmem [thread:$0]  %s533, 16, %s536, %s526
        $region44: #{tpu_custom_call.1} parent=15 // pred_fallthru
          _
        // Predicated region
        $region45: #{tpu_custom_call.1} parent=15 // pred_check
          %p539 = pneg %p256
        $region46: #{tpu_custom_call.1} parent=15 // pred_check_branch
          %541 = sbr.rel (%p539) target = $region48
        $region47: #{tpu_custom_call.1} parent=15 // pred_region
          %s542 = sand.u32 %s42, 1
          %s543 = scalar_lea.sflag [#allocation16], %s542
          %s544 = sand.u32 %s246, 1
          %s545 = scalar_lea.vmem [#allocation15], %s544
          %s547 = ssub.s32 16, 16
          %548 = vsyncadd %s543, %s547
          %s549 = smul.addr %s50, 16
          %s550 = scalar_lea.hbm %s7, %s549
          %s552 = sshll.u32 %s545, 4
          %s553 = int_to_ptr.vmem [resolvable:$true] %s552
          %555 = dma.hbm_to_vmem [thread:$0]  %s550, 16, %s553, %s543
        $region48: #{tpu_custom_call.1} parent=15 // pred_fallthru
          _
        // Predicated region
        $region49: #{tpu_custom_call.1} parent=15 // pred_check
          %p556 = pneg %p282
        $region50: #{tpu_custom_call.1} parent=15 // pred_check_branch
          %558 = sbr.rel (%p556) target = $region52
        $region51: #{tpu_custom_call.1} parent=15 // pred_region
          %s559 = sand.u32 %s42, 1
          %s560 = scalar_lea.sflag [#allocation16], %s559
          %s561 = sand.u32 %s272, 1
          %s562 = smul.addr %s561, 16
          %s563 = scalar_lea.vmem [#allocation17], %s562
          %s565 = ssub.s32 256, 256
          %566 = vsyncadd %s560, %s565
          %s567 = smul.addr %s50, 4
          %s568 = smul.addr %s567, 64
          %s569 = scalar_lea.hbm %s8, %s568
          %s570 = sshll.u32 %s563, 4
          %s571 = int_to_ptr.vmem [resolvable:$true] %s570
          %576 = dma.hbm_to_vmem [thread:$0]  %s569, 256, %s571, %s560, 64, 64, 4
        $region52: #{tpu_custom_call.1} parent=15 // pred_fallthru
          _
        // Predicated region
        $region53: #{tpu_custom_call.1} parent=15 // pred_check
          %p577 = pneg %p308
        $region54: #{tpu_custom_call.1} parent=15 // pred_check_branch
          %579 = sbr.rel (%p577) target = $region56
        $region55: #{tpu_custom_call.1} parent=15 // pred_region
          %s580 = sand.u32 %s42, 1
          %s581 = scalar_lea.sflag [#allocation19], %s580
          %s582 = sand.u32 %s298, 1
          %s583 = scalar_lea.vmem [#allocation18], %s582
          %s585 = ssub.s32 16, 16
          %586 = vsyncadd %s581, %s585
          %s587 = smul.addr %s50, 16
          %s588 = scalar_lea.hbm %s9, %s587
          %s590 = sshll.u32 %s583, 4
          %s591 = int_to_ptr.vmem [resolvable:$true] %s590
          %593 = dma.hbm_to_vmem [thread:$0]  %s588, 16, %s591, %s581
        $region56: #{tpu_custom_call.1} parent=15 // pred_fallthru
          _
        // Predicated region
        $region57: #{tpu_custom_call.1} parent=15 // pred_check
          %p594 = pneg %p334
        $region58: #{tpu_custom_call.1} parent=15 // pred_check_branch
          %596 = sbr.rel (%p594) target = $region60
        $region59: #{tpu_custom_call.1} parent=15 // pred_region
          %s597 = sand.u32 %s42, 1
          %s598 = scalar_lea.sflag [#allocation19], %s597
          %s599 = sand.u32 %s324, 1
          %s600 = smul.addr %s599, 32
          %s601 = scalar_lea.vmem [#allocation20], %s600
          %s603 = ssub.s32 512, 512
          %604 = vsyncadd %s598, %s603
          %s605 = smul.addr %s50, 8
          %s606 = smul.addr %s605, 64
          %s607 = scalar_lea.hbm %s10, %s606
          %s608 = sshll.u32 %s601, 4
          %s609 = int_to_ptr.vmem [resolvable:$true] %s608
          %614 = dma.hbm_to_vmem [thread:$0]  %s607, 512, %s609, %s598, 64, 64, 4
        $region60: #{tpu_custom_call.1} parent=15 // pred_fallthru
          _
        // Predicated region
        $region61: #{tpu_custom_call.1} parent=15 // pred_check
          %p615 = pneg %p360
        $region62: #{tpu_custom_call.1} parent=15 // pred_check_branch
          %617 = sbr.rel (%p615) target = $region64
        $region63: #{tpu_custom_call.1} parent=15 // pred_region
          %s618 = sand.u32 %s350, 1
          %s619 = scalar_lea.sflag [#allocation22], %s618
          %s620 = sand.u32 %s350, 1
          %s621 = scalar_lea.vmem [#allocation21], %s620
          %s623 = ssub.s32 16, 16
          %624 = vsyncadd %s619, %s623
          %s625 = smul.addr %s50, 16
          %s626 = scalar_lea.hbm %s11, %s625
          %s628 = sshll.u32 %s621, 4
          %s629 = int_to_ptr.vmem [resolvable:$true] %s628
          %631 = dma.hbm_to_vmem [thread:$0]  %s626, 16, %s629, %s619
        $region64: #{tpu_custom_call.1} parent=15 // pred_fallthru
          _
      $region16: #{tpu_custom_call.1} parent=5 // pred_fallthru
        _
      %p632 = scmp.le.s32.totalorder 1, %s42
      %p633 = scmp.lt.s32.totalorder %s42, 5
      %p634 = pnand %p632, %p633
      %p635 = pneg %p634
      // Predicated region
      $region65: #{tpu_custom_call.1} parent=5 // pred_check
        _
      $region66: #{tpu_custom_call.1} parent=5 // pred_check_branch
        %637 = sbr.rel (%p634) target = $region68
      $region67: #{tpu_custom_call.1} parent=5 // pred_region
        %s638 = ssub.s32 %s42, 1
        %s639 = sand.u32 %s67, 1
        %s640 = scalar_lea.sflag [#allocation4], %s639
        %s641 = sand.u32 %s67, 1
        %s642 = smul.addr %s641, 8
        %s643 = scalar_lea.vmem [#allocation3], %s642
        // Predicated region
        $region69: #{tpu_custom_call.1} parent=67 // pred_check
          %p644 = pneg %p80
        $region70: #{tpu_custom_call.1} parent=67 // pred_check_branch
          %646 = sbr.rel (%p644) target = $region72
        $region71: #{tpu_custom_call.1} parent=67 // pred_region
          %647 = dma.done %s640, 128
        $region72: #{tpu_custom_call.1} parent=67 // pred_fallthru
          _
        %s648 = sand.u32 %s47, 1
        %s649 = scalar_lea.sflag [#allocation7], %s648
        %s650 = sand.u32 %s93, 1
        %s651 = scalar_lea.vmem [#allocation6], %s650
        // Predicated region
        $region73: #{tpu_custom_call.1} parent=67 // pred_check
          %p652 = pneg %p106
        $region74: #{tpu_custom_call.1} parent=67 // pred_check_branch
          %654 = sbr.rel (%p652) target = $region76
        $region75: #{tpu_custom_call.1} parent=67 // pred_region
          %655 = dma.done %s649, 16
        $region76: #{tpu_custom_call.1} parent=67 // pred_fallthru
          _
        %s656 = sand.u32 %s47, 1
        %s657 = scalar_lea.sflag [#allocation7], %s656
        %s658 = sand.u32 %s119, 1
        %s659 = scalar_lea.vmem [#allocation8], %s658
        // Predicated region
        $region77: #{tpu_custom_call.1} parent=67 // pred_check
          %p660 = pneg %p132
        $region78: #{tpu_custom_call.1} parent=67 // pred_check_branch
          %662 = sbr.rel (%p660) target = $region80
        $region79: #{tpu_custom_call.1} parent=67 // pred_region
          %663 = dma.done %s657, 16
        $region80: #{tpu_custom_call.1} parent=67 // pred_fallthru
          _
        %s664 = sand.u32 %s47, 1
        %s665 = scalar_lea.sflag [#allocation10], %s664
        %s666 = sand.u32 %s145, 1
        %s667 = smul.addr %s666, 16
        %s668 = scalar_lea.vmem [#allocation9], %s667
        // Predicated region
        $region81: #{tpu_custom_call.1} parent=67 // pred_check
          %p669 = pneg %p158
        $region82: #{tpu_custom_call.1} parent=67 // pred_check_branch
          %671 = sbr.rel (%p669) target = $region84
        $region83: #{tpu_custom_call.1} parent=67 // pred_region
          %672 = dma.done %s665, 256
        $region84: #{tpu_custom_call.1} parent=67 // pred_fallthru
          _
        %s673 = sand.u32 %s47, 1
        %s674 = scalar_lea.sflag [#allocation10], %s673
        %s675 = sand.u32 %s171, 1
        %s676 = smul.addr %s675, 16
        %s677 = scalar_lea.vmem [#allocation11], %s676
        // Predicated region
        $region85: #{tpu_custom_call.1} parent=67 // pred_check
          %p678 = pneg %p184
        $region86: #{tpu_custom_call.1} parent=67 // pred_check_branch
          %680 = sbr.rel (%p678) target = $region88
        $region87: #{tpu_custom_call.1} parent=67 // pred_region
          %681 = dma.done %s674, 256
        $region88: #{tpu_custom_call.1} parent=67 // pred_fallthru
          _
        %s682 = sand.u32 %s47, 1
        %s683 = scalar_lea.sflag [#allocation13], %s682
        %s684 = sand.u32 %s197, 1
        %s685 = scalar_lea.vmem [#allocation12], %s684
        // Predicated region
        $region89: #{tpu_custom_call.1} parent=67 // pred_check
          %p686 = pneg %p210
        $region90: #{tpu_custom_call.1} parent=67 // pred_check_branch
          %688 = sbr.rel (%p686) target = $region92
        $region91: #{tpu_custom_call.1} parent=67 // pred_region
          %689 = dma.done %s683, 16
        $region92: #{tpu_custom_call.1} parent=67 // pred_fallthru
          _
        %s690 = sand.u32 %s47, 1
        %s691 = scalar_lea.sflag [#allocation13], %s690
        %s692 = sand.u32 %s223, 1
        %s693 = scalar_lea.vmem [#allocation14], %s692
        // Predicated region
        $region93: #{tpu_custom_call.1} parent=67 // pred_check
          %p694 = pneg %p236
        $region94: #{tpu_custom_call.1} parent=67 // pred_check_branch
          %696 = sbr.rel (%p694) target = $region96
        $region95: #{tpu_custom_call.1} parent=67 // pred_region
          %697 = dma.done %s691, 16
        $region96: #{tpu_custom_call.1} parent=67 // pred_fallthru
          _
        %s698 = sand.u32 %s47, 1
        %s699 = scalar_lea.sflag [#allocation16], %s698
        %s700 = sand.u32 %s249, 1
        %s701 = scalar_lea.vmem [#allocation15], %s700
        // Predicated region
        $region97: #{tpu_custom_call.1} parent=67 // pred_check
          %p702 = pneg %p262
        $region98: #{tpu_custom_call.1} parent=67 // pred_check_branch
          %704 = sbr.rel (%p702) target = $region100
        $region99: #{tpu_custom_call.1} parent=67 // pred_region
          %705 = dma.done %s699, 16
        $region100: #{tpu_custom_call.1} parent=67 // pred_fallthru
          _
        %s706 = sand.u32 %s47, 1
        %s707 = scalar_lea.sflag [#allocation16], %s706
        %s708 = sand.u32 %s275, 1
        %s709 = smul.addr %s708, 16
        %s710 = scalar_lea.vmem [#allocation17], %s709
        // Predicated region
        $region101: #{tpu_custom_call.1} parent=67 // pred_check
          %p711 = pneg %p288
        $region102: #{tpu_custom_call.1} parent=67 // pred_check_branch
          %713 = sbr.rel (%p711) target = $region104
        $region103: #{tpu_custom_call.1} parent=67 // pred_region
          %714 = dma.done %s707, 256
        $region104: #{tpu_custom_call.1} parent=67 // pred_fallthru
          _
        %s715 = sand.u32 %s47, 1
        %s716 = scalar_lea.sflag [#allocation19], %s715
        %s717 = sand.u32 %s301, 1
        %s718 = scalar_lea.vmem [#allocation18], %s717
        // Predicated region
        $region105: #{tpu_custom_call.1} parent=67 // pred_check
          %p719 = pneg %p314
        $region106: #{tpu_custom_call.1} parent=67 // pred_check_branch
          %721 = sbr.rel (%p719) target = $region108
        $region107: #{tpu_custom_call.1} parent=67 // pred_region
          %722 = dma.done %s716, 16
        $region108: #{tpu_custom_call.1} parent=67 // pred_fallthru
          _
        %s723 = sand.u32 %s47, 1
        %s724 = scalar_lea.sflag [#allocation19], %s723
        %s725 = sand.u32 %s327, 1
        %s726 = smul.addr %s725, 32
        %s727 = scalar_lea.vmem [#allocation20], %s726
        // Predicated region
        $region109: #{tpu_custom_call.1} parent=67 // pred_check
          %p728 = pneg %p340
        $region110: #{tpu_custom_call.1} parent=67 // pred_check_branch
          %730 = sbr.rel (%p728) target = $region112
        $region111: #{tpu_custom_call.1} parent=67 // pred_region
          %731 = dma.done %s724, 512
        $region112: #{tpu_custom_call.1} parent=67 // pred_fallthru
          _
        %s732 = sand.u32 %s353, 1
        %s733 = scalar_lea.sflag [#allocation22], %s732
        %s734 = sand.u32 %s353, 1
        %s735 = scalar_lea.vmem [#allocation21], %s734
        // Predicated region
        $region113: #{tpu_custom_call.1} parent=67 // pred_check
          %p736 = pneg %p366
        $region114: #{tpu_custom_call.1} parent=67 // pred_check_branch
          %738 = sbr.rel (%p736) target = $region116
        $region115: #{tpu_custom_call.1} parent=67 // pred_region
          %739 = dma.done %s733, 16
        $region116: #{tpu_custom_call.1} parent=67 // pred_fallthru
          _
        %s740 = sand.u32 %s67, 1
        %s741 = scalar_lea.sflag [#allocation4], %s740
        %s742 = sand.u32 %s67, 1
        %s743 = smul.addr %s742, 8
        %s744 = scalar_lea.vmem [#allocation3], %s743
        %p745 = pneg %p80
        %p746 = pneg %p77
        %s747 = sand.u32 %s47, 1
        %s748 = scalar_lea.sflag [#allocation7], %s747
        %s749 = sand.u32 %s93, 1
        %s750 = scalar_lea.vmem [#allocation6], %s749
        %p751 = pneg %p106
        %p752 = pneg %p103
        %s753 = sand.u32 %s47, 1
        %s754 = scalar_lea.sflag [#allocation7], %s753
        %s755 = sand.u32 %s119, 1
        %s756 = scalar_lea.vmem [#allocation8], %s755
        %p757 = pneg %p132
        %p758 = pneg %p129
        %s759 = sand.u32 %s47, 1
        %s760 = scalar_lea.sflag [#allocation10], %s759
        %s761 = sand.u32 %s145, 1
        %s762 = smul.addr %s761, 16
        %s763 = scalar_lea.vmem [#allocation9], %s762
        %p764 = pneg %p158
        %p765 = pneg %p155
        %s766 = sand.u32 %s47, 1
        %s767 = scalar_lea.sflag [#allocation10], %s766
        %s768 = sand.u32 %s171, 1
        %s769 = smul.addr %s768, 16
        %s770 = scalar_lea.vmem [#allocation11], %s769
        %p771 = pneg %p184
        %p772 = pneg %p181
        %s773 = sand.u32 %s47, 1
        %s774 = scalar_lea.sflag [#allocation13], %s773
        %s775 = sand.u32 %s197, 1
        %s776 = scalar_lea.vmem [#allocation12], %s775
        %p777 = pneg %p210
        %p778 = pneg %p207
        %s779 = sand.u32 %s47, 1
        %s780 = scalar_lea.sflag [#allocation13], %s779
        %s781 = sand.u32 %s223, 1
        %s782 = scalar_lea.vmem [#allocation14], %s781
        %p783 = pneg %p236
        %p784 = pneg %p233
        %s785 = sand.u32 %s47, 1
        %s786 = scalar_lea.sflag [#allocation16], %s785
        %s787 = sand.u32 %s249, 1
        %s788 = scalar_lea.vmem [#allocation15], %s787
        %p789 = pneg %p262
        %p790 = pneg %p259
        %s791 = sand.u32 %s47, 1
        %s792 = scalar_lea.sflag [#allocation16], %s791
        %s793 = sand.u32 %s275, 1
        %s794 = smul.addr %s793, 16
        %s795 = scalar_lea.vmem [#allocation17], %s794
        %p796 = pneg %p288
        %p797 = pneg %p285
        %s798 = sand.u32 %s47, 1
        %s799 = scalar_lea.sflag [#allocation19], %s798
        %s800 = sand.u32 %s301, 1
        %s801 = scalar_lea.vmem [#allocation18], %s800
        %p802 = pneg %p314
        %p803 = pneg %p311
        %s804 = sand.u32 %s47, 1
        %s805 = scalar_lea.sflag [#allocation19], %s804
        %s806 = sand.u32 %s327, 1
        %s807 = smul.addr %s806, 32
        %s808 = scalar_lea.vmem [#allocation20], %s807
        %p809 = pneg %p340
        %p810 = pneg %p337
        %s811 = sand.u32 %s353, 1
        %s812 = scalar_lea.sflag [#allocation22], %s811
        %s813 = sand.u32 %s353, 1
        %s814 = scalar_lea.vmem [#allocation21], %s813
        %p815 = pneg %p366
        %p816 = pneg %p363
        %p817 = pneg %p392
        %p818 = pneg %p389
        %s819 = sand.u32 %s379, 1
        %s820 = scalar_lea.sflag [#allocation5], %s819
        %s821 = sand.u32 %s379, 1
        %s822 = smul.addr %s821, 8
        %s823 = scalar_lea.vmem [#allocation23], %s822
        %p825 = scmp.eq.s32.totalorder %s52, 0
        // Predicated region
        $region117: #{tpu_custom_call.1} parent=67 // pred_check
          %p826 = pneg %p825
        $region118: #{tpu_custom_call.1} parent=67 // pred_check_branch
          %828 = sbr.rel (%p826) target = $region120
        $region119: #{tpu_custom_call.1} parent=67 // pred_region
          %v829 = vld [vmem:[%s643] sm:$0xff]
          %vm830 = vcmask 261120
          %831 = vst.msk [vmem:[#allocation2] sm:$0xff] %vm830, %v829
        $region120: #{tpu_custom_call.1} parent=67 // pred_fallthru
          _
        %v832 = vld [vmem:[#allocation2] sm:$0xff]
        %v833 = vld [vmem:[%s651] sm:$0x1]
        %v834 = vld [vmem:[%s659] sm:$0x1]
        %vm835 = vcmask 261120
        %v836 = vsel %vm835, %v832, 0.0
        %837 = vadd.xlane.f32.xlu0 %v836
        %v838 = vpop.xlane.xlu0 %837
        %v839 = vrcp.pop 32.0
        %v840 = vmul.f32 %v838, %v839
        %v841 = vsub.f32 %v832, %v840
        %v842 = vmul.f32 %v841, %v841
        %v843 = vsel %vm835, %v842, 0.0
        %844 = vadd.xlane.f32.xlu0 %v843
        %v845 = vpop.xlane.xlu0 %844
        %v846 = vmul.f32 %v845, %v839
        %v847 = vadd.f32 %v846, 1e-05
        %v848 = vrsqrt.pop %v847
        %v849 = vmul.f32 %v841, %v848
        %v851 = vlaneseq
        %v852 = vshrl.u32 %v851, 7
        %v853 = vsub.s32 0, %v852
        %v854 = vrot.slane %v833, %v853
        %v856 = vmul.f32 %v849, %v854
        %v858 = vlaneseq
        %v859 = vshrl.u32 %v858, 7
        %v860 = vsub.s32 0, %v859
        %v861 = vrot.slane %v834, %v860
        %v863 = vadd.f32 %v856, %v861
        %v864 = vpack.c.bf16 %v863, %v863
        %v865 = vld [vmem:[%s668] sm:$0xf]
        %v866 = vld [vmem:[%s668 + $0x4] sm:$0xf]
        %v867 = vld [vmem:[%s668 + $0x8] sm:$0xf]
        %v868 = vld [vmem:[%s668 + $0xc] sm:$0xf]
        %v873 = vunpack.c.l.b16 %v865
        %v874 = vunpack.c.l.b16 %v866
        %v875 = vunpack.c.l.b16 %v867
        %v876 = vunpack.c.l.b16 %v868
        %v877 = vpack.c.b16 %v874, %v873
        %v878 = vpack.c.b16 %v876, %v875
        %v882 = vsel %vm835, %v864, 0
        %884 = vmatprep.subr.bf16.mxu0 0
        %885 = vmatpush1.bf16.msra.mxu0 %v877
        %886 = vmatprep.subr.bf16.mxu0 0
        %887 = vmatpush1.bf16.msra.mxu0 %v878
        %888 = vmatprep.subr.bf16.mxu0 0
        %889 = vmatpush1.bf16.msra.mxu0 0
        %890 = vmatprep.subr.bf16.mxu0 0
        %891 = vmatpush1.bf16.msra.mxu0 0
        %892 = vmatprep.subr.bf16.mxu0 0
        %893 = vmatpush1.bf16.msra.mxu0 0
        %894 = vmatprep.subr.bf16.mxu0 0
        %895 = vmatpush1.bf16.msra.mxu0 0
        %896 = vmatprep.subr.bf16.mxu0 0
        %897 = vmatpush1.bf16.msra.mxu0 0
        %898 = vmatprep.subr.bf16.mxu0 0
        %899 = vmatpush1.bf16.msra.mxu0 0
        %900 = vmatprep.subr.bf16.mxu0 0
        %901 = vmatpush1.bf16.msra.mxu0 0
        %902 = vmatprep.subr.bf16.mxu0 0
        %903 = vmatpush1.bf16.msra.mxu0 0
        %904 = vmatprep.subr.bf16.mxu0 0
        %905 = vmatpush1.bf16.msra.mxu0 0
        %906 = vmatprep.subr.bf16.mxu0 0
        %907 = vmatpush1.bf16.msra.mxu0 0
        %908 = vmatprep.subr.bf16.mxu0 0
        %909 = vmatpush1.bf16.msra.mxu0 0
        %910 = vmatprep.subr.bf16.mxu0 0
        %911 = vmatpush1.bf16.msra.mxu0 0
        %912 = vmatprep.subr.bf16.mxu0 0
        %913 = vmatpush1.bf16.msra.mxu0 0
        %914 = vmatprep.subr.bf16.mxu0 0
        %915 = vmatpush1.bf16.msra.mxu0 0
        %916 = vmatprep.mubr.bf16.mxu0 0
        %917 = vmatmul.mubr.bf16.gmra.mrb[0].mxu0 %v882
        %v918 = vpop.f32.mrb[0].mxu0
        %v919 = vadd.f32 0.0, %v918
        %v920 = vpop.f32.mrb[0].mxu0
        %v921 = vpop.f32.mrb[0].mxu0
        %v922 = vpop.f32.mrb[0].mxu0
        %923 = vdwg.mxu0
        %v924 = vmul.f32 %v919, 0.35355338
        %926 = vrot.lane.b32.xlu0 %v924, 120
        %v927 = vpop.permute.xlu0 %926
        %929 = vrot.lane.b32.xlu0 %v924, 112
        %v930 = vpop.permute.xlu0 %929
        %932 = vrot.lane.b32.xlu0 %v924, 104
        %v933 = vpop.permute.xlu0 %932
        %v935 = vpack.c.bf16 %v924, %v924
        %v936 = vpack.c.bf16 %v927, %v927
        %v937 = vpack.c.bf16 %v930, %v930
        %v938 = vpack.c.bf16 %v933, %v933
        %940 = vrot.lane.b32.xlu0 %v919, 120
        %v941 = vpop.permute.xlu0 %940
        %943 = vrot.lane.b32.xlu0 %v919, 112
        %v944 = vpop.permute.xlu0 %943
        %946 = vrot.lane.b32.xlu0 %v919, 104
        %v947 = vpop.permute.xlu0 %946
        %v949 = vpack.c.bf16 %v919, %v919
        %v950 = vpack.c.bf16 %v941, %v941
        %v951 = vpack.c.bf16 %v944, %v944
        %v952 = vpack.c.bf16 %v947, %v947
        %954 = vrot.lane.b32.xlu0 %v949, 96
        %v955 = vpop.permute.xlu0 %954
        %vm956 = vcmask 64512
        %v958 = vsel %vm956, %v935, 0
        %v961 = vsel %vm956, %v955, 0
        %963 = vmatprep.subr.bf16.mxu0 0
        %964 = vmatpush1.bf16.xpose.msra.mxu0 %v961
        %965 = vmatprep.subr.bf16.mxu0 0
        %966 = vmatpush1.bf16.xpose.msra.mxu0 0
        %967 = vmatprep.subr.bf16.mxu0 0
        %968 = vmatpush1.bf16.xpose.msra.mxu0 0
        %969 = vmatprep.subr.bf16.mxu0 0
        %970 = vmatpush1.bf16.xpose.msra.mxu0 0
        %971 = vmatprep.subr.bf16.mxu0 0
        %972 = vmatpush1.bf16.xpose.msra.mxu0 0
        %973 = vmatprep.subr.bf16.mxu0 0
        %974 = vmatpush1.bf16.xpose.msra.mxu0 0
        %975 = vmatprep.subr.bf16.mxu0 0
        %976 = vmatpush1.bf16.xpose.msra.mxu0 0
        %977 = vmatprep.subr.bf16.mxu0 0
        %978 = vmatpush1.bf16.xpose.msra.mxu0 0
        %979 = vmatprep.subr.bf16.mxu0 0
        %980 = vmatpush1.bf16.xpose.msra.mxu0 0
        %981 = vmatprep.subr.bf16.mxu0 0
        %982 = vmatpush1.bf16.xpose.msra.mxu0 0
        %983 = vmatprep.subr.bf16.mxu0 0
        %984 = vmatpush1.bf16.xpose.msra.mxu0 0
        %985 = vmatprep.subr.bf16.mxu0 0
        %986 = vmatpush1.bf16.xpose.msra.mxu0 0
        %987 = vmatprep.subr.bf16.mxu0 0
        %988 = vmatpush1.bf16.xpose.msra.mxu0 0
        %989 = vmatprep.subr.bf16.mxu0 0
        %990 = vmatpush1.bf16.xpose.msra.mxu0 0
        %991 = vmatprep.subr.bf16.mxu0 0
        %992 = vmatpush1.bf16.xpose.msra.mxu0 0
        %993 = vmatprep.subr.bf16.mxu0 0
        %994 = vmatpush1.bf16.xpose.msra.mxu0 0
        %995 = vmatprep.mubr.bf16.mxu0 0
        %996 = vmatmul.mubr.bf16.gmra.mrb[0].mxu0 %v958
        %v997 = vpop.f32.mrb[0].mxu0
        %v998 = vadd.f32 0.0, %v997
        %v999 = vpop.f32.mrb[0].mxu0
        %v1000 = vpop.f32.mrb[0].mxu0
        %v1001 = vpop.f32.mrb[0].mxu0
        %1002 = vdwg.mxu0
        %1004 = vrot.lane.b32.xlu0 %v950, 96
        %v1005 = vpop.permute.xlu0 %1004
        %v1007 = vsel %vm956, %v936, 0
        %v1010 = vsel %vm956, %v1005, 0
        %1012 = vmatprep.subr.bf16.mxu0 0
        %1013 = vmatpush1.bf16.xpose.msra.mxu0 %v1010
        %1014 = vmatprep.subr.bf16.mxu0 0
        %1015 = vmatpush1.bf16.xpose.msra.mxu0 0
        %1016 = vmatprep.subr.bf16.mxu0 0
        %1017 = vmatpush1.bf16.xpose.msra.mxu0 0
        %1018 = vmatprep.subr.bf16.mxu0 0
        %1019 = vmatpush1.bf16.xpose.msra.mxu0 0
        %1020 = vmatprep.subr.bf16.mxu0 0
        %1021 = vmatpush1.bf16.xpose.msra.mxu0 0
        %1022 = vmatprep.subr.bf16.mxu0 0
        %1023 = vmatpush1.bf16.xpose.msra.mxu0 0
        %1024 = vmatprep.subr.bf16.mxu0 0
        %1025 = vmatpush1.bf16.xpose.msra.mxu0 0
        %1026 = vmatprep.subr.bf16.mxu0 0
        %1027 = vmatpush1.bf16.xpose.msra.mxu0 0
        %1028 = vmatprep.subr.bf16.mxu0 0
        %1029 = vmatpush1.bf16.xpose.msra.mxu0 0
        %1030 = vmatprep.subr.bf16.mxu0 0
        %1031 = vmatpush1.bf16.xpose.msra.mxu0 0
        %1032 = vmatprep.subr.bf16.mxu0 0
        %1033 = vmatpush1.bf16.xpose.msra.mxu0 0
        %1034 = vmatprep.subr.bf16.mxu0 0
        %1035 = vmatpush1.bf16.xpose.msra.mxu0 0
        %1036 = vmatprep.subr.bf16.mxu0 0
        %1037 = vmatpush1.bf16.xpose.msra.mxu0 0
        %1038 = vmatprep.subr.bf16.mxu0 0
        %1039 = vmatpush1.bf16.xpose.msra.mxu0 0
        %1040 = vmatprep.subr.bf16.mxu0 0
        %1041 = vmatpush1.bf16.xpose.msra.mxu0 0
        %1042 = vmatprep.subr.bf16.mxu0 0
        %1043 = vmatpush1.bf16.xpose.msra.mxu0 0
        %1044 = vmatprep.mubr.bf16.mxu0 0
        %1045 = vmatmul.mubr.bf16.gmra.mrb[0].mxu0 %v1007
        %v1046 = vpop.f32.mrb[0].mxu0
        %v1047 = vadd.f32 0.0, %v1046
        %v1048 = vpop.f32.mrb[0].mxu0
        %v1049 = vpop.f32.mrb[0].mxu0
        %v1050 = vpop.f32.mrb[0].mxu0
        %1051 = vdwg.mxu0
        %1053 = vrot.lane.b32.xlu0 %v951, 96
        %v1054 = vpop.permute.xlu0 %1053
        %v1056 = vsel %vm956, %v937, 0
        %v1059 = vsel %vm956, %v1054, 0
        %1061 = vmatprep.subr.bf16.mxu0 0
        %1062 = vmatpush1.bf16.xpose.msra.mxu0 %v1059
        %1063 = vmatprep.subr.bf16.mxu0 0
        %1064 = vmatpush1.bf16.xpose.msra.mxu0 0
        %1065 = vmatprep.subr.bf16.mxu0 0
        %1066 = vmatpush1.bf16.xpose.msra.mxu0 0
        %1067 = vmatprep.subr.bf16.mxu0 0
        %1068 = vmatpush1.bf16.xpose.msra.mxu0 0
        %1069 = vmatprep.subr.bf16.mxu0 0
        %1070 = vmatpush1.bf16.xpose.msra.mxu0 0
        %1071 = vmatprep.subr.bf16.mxu0 0
        %1072 = vmatpush1.bf16.xpose.msra.mxu0 0
        %1073 = vmatprep.subr.bf16.mxu0 0
        %1074 = vmatpush1.bf16.xpose.msra.mxu0 0
        %1075 = vmatprep.subr.bf16.mxu0 0
        %1076 = vmatpush1.bf16.xpose.msra.mxu0 0
        %1077 = vmatprep.subr.bf16.mxu0 0
        %1078 = vmatpush1.bf16.xpose.msra.mxu0 0
        %1079 = vmatprep.subr.bf16.mxu0 0
        %1080 = vmatpush1.bf16.xpose.msra.mxu0 0
        %1081 = vmatprep.subr.bf16.mxu0 0
        %1082 = vmatpush1.bf16.xpose.msra.mxu0 0
        %1083 = vmatprep.subr.bf16.mxu0 0
        %1084 = vmatpush1.bf16.xpose.msra.mxu0 0
        %1085 = vmatprep.subr.bf16.mxu0 0
        %1086 = vmatpush1.bf16.xpose.msra.mxu0 0
        %1087 = vmatprep.subr.bf16.mxu0 0
        %1088 = vmatpush1.bf16.xpose.msra.mxu0 0
        %1089 = vmatprep.subr.bf16.mxu0 0
        %1090 = vmatpush1.bf16.xpose.msra.mxu0 0
        %1091 = vmatprep.subr.bf16.mxu0 0
        %1092 = vmatpush1.bf16.xpose.msra.mxu0 0
        %1093 = vmatprep.mubr.bf16.mxu0 0
        %1094 = vmatmul.mubr.bf16.gmra.mrb[0].mxu0 %v1056
        %v1095 = vpop.f32.mrb[0].mxu0
        %v1096 = vadd.f32 0.0, %v1095
        %v1097 = vpop.f32.mrb[0].mxu0
        %v1098 = vpop.f32.mrb[0].mxu0
        %v1099 = vpop.f32.mrb[0].mxu0
        %1100 = vdwg.mxu0
        %1102 = vrot.lane.b32.xlu0 %v952, 96
        %v1103 = vpop.permute.xlu0 %1102
        %v1105 = vsel %vm956, %v938, 0
        %v1108 = vsel %vm956, %v1103, 0
        %1110 = vmatprep.subr.bf16.mxu0 0
        %1111 = vmatpush1.bf16.xpose.msra.mxu0 %v1108
        %1112 = vmatprep.subr.bf16.mxu0 0
        %1113 = vmatpush1.bf16.xpose.msra.mxu0 0
        %1114 = vmatprep.subr.bf16.mxu0 0
        %1115 = vmatpush1.bf16.xpose.msra.mxu0 0
        %1116 = vmatprep.subr.bf16.mxu0 0
        %1117 = vmatpush1.bf16.xpose.msra.mxu0 0
        %1118 = vmatprep.subr.bf16.mxu0 0
        %1119 = vmatpush1.bf16.xpose.msra.mxu0 0
        %1120 = vmatprep.subr.bf16.mxu0 0
        %1121 = vmatpush1.bf16.xpose.msra.mxu0 0
        %1122 = vmatprep.subr.bf16.mxu0 0
        %1123 = vmatpush1.bf16.xpose.msra.mxu0 0
        %1124 = vmatprep.subr.bf16.mxu0 0
        %1125 = vmatpush1.bf16.xpose.msra.mxu0 0
        %1126 = vmatprep.subr.bf16.mxu0 0
        %1127 = vmatpush1.bf16.xpose.msra.mxu0 0
        %1128 = vmatprep.subr.bf16.mxu0 0
        %1129 = vmatpush1.bf16.xpose.msra.mxu0 0
        %1130 = vmatprep.subr.bf16.mxu0 0
        %1131 = vmatpush1.bf16.xpose.msra.mxu0 0
        %1132 = vmatprep.subr.bf16.mxu0 0
        %1133 = vmatpush1.bf16.xpose.msra.mxu0 0
        %1134 = vmatprep.subr.bf16.mxu0 0
        %1135 = vmatpush1.bf16.xpose.msra.mxu0 0
        %1136 = vmatprep.subr.bf16.mxu0 0
        %1137 = vmatpush1.bf16.xpose.msra.mxu0 0
        %1138 = vmatprep.subr.bf16.mxu0 0
        %1139 = vmatpush1.bf16.xpose.msra.mxu0 0
        %1140 = vmatprep.subr.bf16.mxu0 0
        %1141 = vmatpush1.bf16.xpose.msra.mxu0 0
        %1142 = vmatprep.mubr.bf16.mxu0 0
        %1143 = vmatmul.mubr.bf16.gmra.mrb[0].mxu0 %v1105
        %v1144 = vpop.f32.mrb[0].mxu0
        %v1145 = vadd.f32 0.0, %v1144
        %v1146 = vpop.f32.mrb[0].mxu0
        %v1147 = vpop.f32.mrb[0].mxu0
        %v1148 = vpop.f32.mrb[0].mxu0
        %1149 = vdwg.mxu0
        %v1150 = vsel %vm956, %v998, -inf
        %1151 = vmax.xlane.f32.xlu0 %v1150
        %v1152 = vpop.xlane.xlu0 %1151
        %v1153 = vsel %vm956, %v1047, -inf
        %1154 = vmax.xlane.f32.xlu0 %v1153
        %v1155 = vpop.xlane.xlu0 %1154
        %v1156 = vsel %vm956, %v1096, -inf
        %1157 = vmax.xlane.f32.xlu0 %v1156
        %v1158 = vpop.xlane.xlu0 %1157
        %v1159 = vsel %vm956, %v1145, -inf
        %1160 = vmax.xlane.f32.xlu0 %v1159
        %v1161 = vpop.xlane.xlu0 %1160
        %v1162 = vsub.f32 %v998, %v1152
        %v1163 = vsub.f32 %v1047, %v1155
        %v1164 = vsub.f32 %v1096, %v1158
        %v1165 = vsub.f32 %v1145, %v1161
        %v1166 = vmul.f32 %v1162, 1.442695
        %v1167 = vpow.pop %v1166
        %v1168 = vmul.f32 %v1163, 1.442695
        %v1169 = vpow.pop %v1168
        %v1170 = vmul.f32 %v1164, 1.442695
        %v1171 = vpow.pop %v1170
        %v1172 = vmul.f32 %v1165, 1.442695
        %v1173 = vpow.pop %v1172
        %v1174 = vsel %vm956, %v1167, 0.0
        %1175 = vadd.xlane.f32.xlu0 %v1174
        %v1176 = vpop.xlane.xlu0 %1175
        %v1177 = vsel %vm956, %v1169, 0.0
        %1178 = vadd.xlane.f32.xlu0 %v1177
        %v1179 = vpop.xlane.xlu0 %1178
        %v1180 = vsel %vm956, %v1171, 0.0
        %1181 = vadd.xlane.f32.xlu0 %v1180
        %v1182 = vpop.xlane.xlu0 %1181
        %v1183 = vsel %vm956, %v1173, 0.0
        %1184 = vadd.xlane.f32.xlu0 %v1183
        %v1185 = vpop.xlane.xlu0 %1184
        %v1186 = vrcp.pop %v1176
        %v1187 = vrcp.pop %v1179
        %v1188 = vrcp.pop %v1182
        %v1189 = vrcp.pop %v1185
        %v1190 = vmul.f32 %v1167, %v1186
        %v1191 = vmul.f32 %v1169, %v1187
        %v1192 = vmul.f32 %v1171, %v1188
        %v1193 = vmul.f32 %v1173, %v1189
        %v1194 = vpack.c.bf16 %v1190, %v1190
        %v1195 = vpack.c.bf16 %v1191, %v1191
        %v1196 = vpack.c.bf16 %v1192, %v1192
        %v1197 = vpack.c.bf16 %v1193, %v1193
        %1198 = vrot.lane.b32.xlu0 %v949, 64
        %v1199 = vpop.permute.xlu0 %1198
        %v1201 = vsel %vm956, %v1194, 0
        %vm1203 = vcmask 1043456
        %v1205 = vsel %vm1203, %v1199, 0
        %1207 = vmatprep.subr.bf16.mxu0 0
        %1208 = vmatpush1.bf16.msra.mxu0 %v1205
        %1209 = vmatprep.subr.bf16.mxu0 0
        %1210 = vmatpush1.bf16.msra.mxu0 0
        %1211 = vmatprep.subr.bf16.mxu0 0
        %1212 = vmatpush1.bf16.msra.mxu0 0
        %1213 = vmatprep.subr.bf16.mxu0 0
        %1214 = vmatpush1.bf16.msra.mxu0 0
        %1215 = vmatprep.subr.bf16.mxu0 0
        %1216 = vmatpush1.bf16.msra.mxu0 0
        %1217 = vmatprep.subr.bf16.mxu0 0
        %1218 = vmatpush1.bf16.msra.mxu0 0
        %1219 = vmatprep.subr.bf16.mxu0 0
        %1220 = vmatpush1.bf16.msra.mxu0 0
        %1221 = vmatprep.subr.bf16.mxu0 0
        %1222 = vmatpush1.bf16.msra.mxu0 0
        %1223 = vmatprep.subr.bf16.mxu0 0
        %1224 = vmatpush1.bf16.msra.mxu0 0
        %1225 = vmatprep.subr.bf16.mxu0 0
        %1226 = vmatpush1.bf16.msra.mxu0 0
        %1227 = vmatprep.subr.bf16.mxu0 0
        %1228 = vmatpush1.bf16.msra.mxu0 0
        %1229 = vmatprep.subr.bf16.mxu0 0
        %1230 = vmatpush1.bf16.msra.mxu0 0
        %1231 = vmatprep.subr.bf16.mxu0 0
        %1232 = vmatpush1.bf16.msra.mxu0 0
        %1233 = vmatprep.subr.bf16.mxu0 0
        %1234 = vmatpush1.bf16.msra.mxu0 0
        %1235 = vmatprep.subr.bf16.mxu0 0
        %1236 = vmatpush1.bf16.msra.mxu0 0
        %1237 = vmatprep.subr.bf16.mxu0 0
        %1238 = vmatpush1.bf16.msra.mxu0 0
        %1239 = vmatprep.mubr.bf16.mxu0 0
        %1240 = vmatmul.mubr.bf16.gmra.mrb[0].mxu0 %v1201
        %v1241 = vpop.f32.mrb[0].mxu0
        %v1242 = vadd.f32 0.0, %v1241
        %v1243 = vpop.f32.mrb[0].mxu0
        %v1244 = vpop.f32.mrb[0].mxu0
        %v1245 = vpop.f32.mrb[0].mxu0
        %1246 = vdwg.mxu0
        %1247 = vrot.lane.b32.xlu0 %v950, 64
        %v1248 = vpop.permute.xlu0 %1247
        %v1250 = vsel %vm956, %v1195, 0
        %v1253 = vsel %vm1203, %v1248, 0
        %1255 = vmatprep.subr.bf16.mxu0 0
        %1256 = vmatpush1.bf16.msra.mxu0 %v1253
        %1257 = vmatprep.subr.bf16.mxu0 0
        %1258 = vmatpush1.bf16.msra.mxu0 0
        %1259 = vmatprep.subr.bf16.mxu0 0
        %1260 = vmatpush1.bf16.msra.mxu0 0
        %1261 = vmatprep.subr.bf16.mxu0 0
        %1262 = vmatpush1.bf16.msra.mxu0 0
        %1263 = vmatprep.subr.bf16.mxu0 0
        %1264 = vmatpush1.bf16.msra.mxu0 0
        %1265 = vmatprep.subr.bf16.mxu0 0
        %1266 = vmatpush1.bf16.msra.mxu0 0
        %1267 = vmatprep.subr.bf16.mxu0 0
        %1268 = vmatpush1.bf16.msra.mxu0 0
        %1269 = vmatprep.subr.bf16.mxu0 0
        %1270 = vmatpush1.bf16.msra.mxu0 0
        %1271 = vmatprep.subr.bf16.mxu0 0
        %1272 = vmatpush1.bf16.msra.mxu0 0
        %1273 = vmatprep.subr.bf16.mxu0 0
        %1274 = vmatpush1.bf16.msra.mxu0 0
        %1275 = vmatprep.subr.bf16.mxu0 0
        %1276 = vmatpush1.bf16.msra.mxu0 0
        %1277 = vmatprep.subr.bf16.mxu0 0
        %1278 = vmatpush1.bf16.msra.mxu0 0
        %1279 = vmatprep.subr.bf16.mxu0 0
        %1280 = vmatpush1.bf16.msra.mxu0 0
        %1281 = vmatprep.subr.bf16.mxu0 0
        %1282 = vmatpush1.bf16.msra.mxu0 0
        %1283 = vmatprep.subr.bf16.mxu0 0
        %1284 = vmatpush1.bf16.msra.mxu0 0
        %1285 = vmatprep.subr.bf16.mxu0 0
        %1286 = vmatpush1.bf16.msra.mxu0 0
        %1287 = vmatprep.mubr.bf16.mxu0 0
        %1288 = vmatmul.mubr.bf16.gmra.mrb[0].mxu0 %v1250
        %v1289 = vpop.f32.mrb[0].mxu0
        %v1290 = vadd.f32 0.0, %v1289
        %v1291 = vpop.f32.mrb[0].mxu0
        %v1292 = vpop.f32.mrb[0].mxu0
        %v1293 = vpop.f32.mrb[0].mxu0
        %1294 = vdwg.mxu0
        %1295 = vrot.lane.b32.xlu0 %v951, 64
        %v1296 = vpop.permute.xlu0 %1295
        %v1298 = vsel %vm956, %v1196, 0
        %v1301 = vsel %vm1203, %v1296, 0
        %1303 = vmatprep.subr.bf16.mxu0 0
        %1304 = vmatpush1.bf16.msra.mxu0 %v1301
        %1305 = vmatprep.subr.bf16.mxu0 0
        %1306 = vmatpush1.bf16.msra.mxu0 0
        %1307 = vmatprep.subr.bf16.mxu0 0
        %1308 = vmatpush1.bf16.msra.mxu0 0
        %1309 = vmatprep.subr.bf16.mxu0 0
        %1310 = vmatpush1.bf16.msra.mxu0 0
        %1311 = vmatprep.subr.bf16.mxu0 0
        %1312 = vmatpush1.bf16.msra.mxu0 0
        %1313 = vmatprep.subr.bf16.mxu0 0
        %1314 = vmatpush1.bf16.msra.mxu0 0
        %1315 = vmatprep.subr.bf16.mxu0 0
        %1316 = vmatpush1.bf16.msra.mxu0 0
        %1317 = vmatprep.subr.bf16.mxu0 0
        %1318 = vmatpush1.bf16.msra.mxu0 0
        %1319 = vmatprep.subr.bf16.mxu0 0
        %1320 = vmatpush1.bf16.msra.mxu0 0
        %1321 = vmatprep.subr.bf16.mxu0 0
        %1322 = vmatpush1.bf16.msra.mxu0 0
        %1323 = vmatprep.subr.bf16.mxu0 0
        %1324 = vmatpush1.bf16.msra.mxu0 0
        %1325 = vmatprep.subr.bf16.mxu0 0
        %1326 = vmatpush1.bf16.msra.mxu0 0
        %1327 = vmatprep.subr.bf16.mxu0 0
        %1328 = vmatpush1.bf16.msra.mxu0 0
        %1329 = vmatprep.subr.bf16.mxu0 0
        %1330 = vmatpush1.bf16.msra.mxu0 0
        %1331 = vmatprep.subr.bf16.mxu0 0
        %1332 = vmatpush1.bf16.msra.mxu0 0
        %1333 = vmatprep.subr.bf16.mxu0 0
        %1334 = vmatpush1.bf16.msra.mxu0 0
        %1335 = vmatprep.mubr.bf16.mxu0 0
        %1336 = vmatmul.mubr.bf16.gmra.mrb[0].mxu0 %v1298
        %v1337 = vpop.f32.mrb[0].mxu0
        %v1338 = vadd.f32 0.0, %v1337
        %v1339 = vpop.f32.mrb[0].mxu0
        %v1340 = vpop.f32.mrb[0].mxu0
        %v1341 = vpop.f32.mrb[0].mxu0
        %1342 = vdwg.mxu0
        %1343 = vrot.lane.b32.xlu0 %v952, 64
        %v1344 = vpop.permute.xlu0 %1343
        %v1346 = vsel %vm956, %v1197, 0
        %v1349 = vsel %vm1203, %v1344, 0
        %1351 = vmatprep.subr.bf16.mxu0 0
        %1352 = vmatpush1.bf16.msra.mxu0 %v1349
        %1353 = vmatprep.subr.bf16.mxu0 0
        %1354 = vmatpush1.bf16.msra.mxu0 0
        %1355 = vmatprep.subr.bf16.mxu0 0
        %1356 = vmatpush1.bf16.msra.mxu0 0
        %1357 = vmatprep.subr.bf16.mxu0 0
        %1358 = vmatpush1.bf16.msra.mxu0 0
        %1359 = vmatprep.subr.bf16.mxu0 0
        %1360 = vmatpush1.bf16.msra.mxu0 0
        %1361 = vmatprep.subr.bf16.mxu0 0
        %1362 = vmatpush1.bf16.msra.mxu0 0
        %1363 = vmatprep.subr.bf16.mxu0 0
        %1364 = vmatpush1.bf16.msra.mxu0 0
        %1365 = vmatprep.subr.bf16.mxu0 0
        %1366 = vmatpush1.bf16.msra.mxu0 0
        %1367 = vmatprep.subr.bf16.mxu0 0
        %1368 = vmatpush1.bf16.msra.mxu0 0
        %1369 = vmatprep.subr.bf16.mxu0 0
        %1370 = vmatpush1.bf16.msra.mxu0 0
        %1371 = vmatprep.subr.bf16.mxu0 0
        %1372 = vmatpush1.bf16.msra.mxu0 0
        %1373 = vmatprep.subr.bf16.mxu0 0
        %1374 = vmatpush1.bf16.msra.mxu0 0
        %1375 = vmatprep.subr.bf16.mxu0 0
        %1376 = vmatpush1.bf16.msra.mxu0 0
        %1377 = vmatprep.subr.bf16.mxu0 0
        %1378 = vmatpush1.bf16.msra.mxu0 0
        %1379 = vmatprep.subr.bf16.mxu0 0
        %1380 = vmatpush1.bf16.msra.mxu0 0
        %1381 = vmatprep.subr.bf16.mxu0 0
        %1382 = vmatpush1.bf16.msra.mxu0 0
        %1383 = vmatprep.mubr.bf16.mxu0 0
        %1384 = vmatmul.mubr.bf16.gmra.mrb[0].mxu0 %v1346
        %v1385 = vpop.f32.mrb[0].mxu0
        %v1386 = vadd.f32 0.0, %v1385
        %v1387 = vpop.f32.mrb[0].mxu0
        %v1388 = vpop.f32.mrb[0].mxu0
        %v1389 = vpop.f32.mrb[0].mxu0
        %1390 = vdwg.mxu0
        %1392 = vrot.lane.b32.xlu0 %v1290, 8
        %v1393 = vpop.permute.xlu0 %1392
        %1396 = vrot.lane.b32.xlu0 %v1338, 16
        %v1397 = vpop.permute.xlu0 %1396
        %1400 = vrot.lane.b32.xlu0 %v1386, 24
        %v1401 = vpop.permute.xlu0 %1400
        %v1403 = vsel %vm956, %v1242, %v1393
        %vm1404 = vcmask 130048
        %v1405 = vsel %vm1404, %v1403, %v1397
        %vm1406 = vcmask 195584
        %v1407 = vsel %vm1406, %v1405, %v1401
        %v1408 = vpack.c.bf16 %v1407, %v1407
        %v1409 = vld [vmem:[%s677] sm:$0xf]
        %v1410 = vld [vmem:[%s677 + $0x4] sm:$0xf]
        %v1411 = vld [vmem:[%s677 + $0x8] sm:$0xf]
        %v1412 = vld [vmem:[%s677 + $0xc] sm:$0xf]
        %v1413 = vld [vmem:[%s685] sm:$0x1]
        %v1415 = vlaneseq
        %v1416 = vshrl.u32 %v1415, 7
        %v1417 = vsub.s32 0, %v1416
        %v1418 = vrot.slane %v1413, %v1417
        %v1424 = vunpack.c.l.b16 %v1409
        %v1425 = vunpack.c.l.b16 %v1410
        %v1426 = vunpack.c.l.b16 %v1411
        %v1427 = vunpack.c.l.b16 %v1412
        %v1428 = vpack.c.b16 %v1425, %v1424
        %v1429 = vpack.c.b16 %v1427, %v1426
        %v1433 = vsel %vm835, %v1408, 0
        %1435 = vmatprep.subr.bf16.mxu0 0
        %1436 = vmatpush1.bf16.msra.mxu0 %v1428
        %1437 = vmatprep.subr.bf16.mxu0 0
        %1438 = vmatpush1.bf16.msra.mxu0 %v1429
        %1439 = vmatprep.subr.bf16.mxu0 0
        %1440 = vmatpush1.bf16.msra.mxu0 0
        %1441 = vmatprep.subr.bf16.mxu0 0
        %1442 = vmatpush1.bf16.msra.mxu0 0
        %1443 = vmatprep.subr.bf16.mxu0 0
        %1444 = vmatpush1.bf16.msra.mxu0 0
        %1445 = vmatprep.subr.bf16.mxu0 0
        %1446 = vmatpush1.bf16.msra.mxu0 0
        %1447 = vmatprep.subr.bf16.mxu0 0
        %1448 = vmatpush1.bf16.msra.mxu0 0
        %1449 = vmatprep.subr.bf16.mxu0 0
        %1450 = vmatpush1.bf16.msra.mxu0 0
        %1451 = vmatprep.subr.bf16.mxu0 0
        %1452 = vmatpush1.bf16.msra.mxu0 0
        %1453 = vmatprep.subr.bf16.mxu0 0
        %1454 = vmatpush1.bf16.msra.mxu0 0
        %1455 = vmatprep.subr.bf16.mxu0 0
        %1456 = vmatpush1.bf16.msra.mxu0 0
        %1457 = vmatprep.subr.bf16.mxu0 0
        %1458 = vmatpush1.bf16.msra.mxu0 0
        %1459 = vmatprep.subr.bf16.mxu0 0
        %1460 = vmatpush1.bf16.msra.mxu0 0
        %1461 = vmatprep.subr.bf16.mxu0 0
        %1462 = vmatpush1.bf16.msra.mxu0 0
        %1463 = vmatprep.subr.bf16.mxu0 0
        %1464 = vmatpush1.bf16.msra.mxu0 0
        %1465 = vmatprep.subr.bf16.mxu0 0
        %1466 = vmatpush1.bf16.msra.mxu0 0
        %1467 = vmatprep.mubr.bf16.mxu0 0
        %1468 = vmatmul.mubr.bf16.gmra.mrb[0].mxu0 %v1433
        %v1469 = vpop.f32.mrb[0].mxu0
        %v1470 = vadd.f32 %v1418, %v1469
        %v1471 = vpop.f32.mrb[0].mxu0
        %v1472 = vpop.f32.mrb[0].mxu0
        %v1473 = vpop.f32.mrb[0].mxu0
        %1474 = vdwg.mxu0
        %v1475 = vadd.f32 %v832, %v1470
        %v1476 = vld [vmem:[%s693] sm:$0x1]
        %v1477 = vld [vmem:[%s701] sm:$0x1]
        %v1478 = vsel %vm835, %v1475, 0.0
        %1479 = vadd.xlane.f32.xlu0 %v1478
        %v1480 = vpop.xlane.xlu0 %1479
        %v1481 = vmul.f32 %v1480, %v839
        %v1482 = vsub.f32 %v1475, %v1481
        %v1483 = vmul.f32 %v1482, %v1482
        %v1484 = vsel %vm835, %v1483, 0.0
        %1485 = vadd.xlane.f32.xlu0 %v1484
        %v1486 = vpop.xlane.xlu0 %1485
        %v1487 = vmul.f32 %v1486, %v839
        %v1488 = vadd.f32 %v1487, 1e-05
        %v1489 = vrsqrt.pop %v1488
        %v1490 = vmul.f32 %v1482, %v1489
        %v1492 = vlaneseq
        %v1493 = vshrl.u32 %v1492, 7
        %v1494 = vsub.s32 0, %v1493
        %v1495 = vrot.slane %v1476, %v1494
        %v1497 = vmul.f32 %v1490, %v1495
        %v1499 = vlaneseq
        %v1500 = vshrl.u32 %v1499, 7
        %v1501 = vsub.s32 0, %v1500
        %v1502 = vrot.slane %v1477, %v1501
        %v1504 = vadd.f32 %v1497, %v1502
        %v1505 = vpack.c.bf16 %v1504, %v1504
        %v1506 = vld [vmem:[%s710] sm:$0xf]
        %v1507 = vld [vmem:[%s710 + $0x4] sm:$0xf]
        %v1508 = vld [vmem:[%s710 + $0x8] sm:$0xf]
        %v1509 = vld [vmem:[%s710 + $0xc] sm:$0xf]
        %v1510 = vld [vmem:[%s718] sm:$0x1]
        %v1512 = vlaneseq
        %v1513 = vshrl.u32 %v1512, 7
        %v1514 = vsub.s32 0, %v1513
        %v1515 = vrot.slane %v1510, %v1514
        %v1521 = vunpack.c.l.b16 %v1506
        %v1522 = vunpack.c.l.b16 %v1507
        %v1523 = vunpack.c.l.b16 %v1508
        %v1524 = vunpack.c.l.b16 %v1509
        %v1525 = vpack.c.b16 %v1522, %v1521
        %v1526 = vpack.c.b16 %v1524, %v1523
        %v1530 = vsel %vm835, %v1505, 0
        %1532 = vmatprep.subr.bf16.mxu0 0
        %1533 = vmatpush1.bf16.msra.mxu0 %v1525
        %1534 = vmatprep.subr.bf16.mxu0 0
        %1535 = vmatpush1.bf16.msra.mxu0 %v1526
        %1536 = vmatprep.subr.bf16.mxu0 0
        %1537 = vmatpush1.bf16.msra.mxu0 0
        %1538 = vmatprep.subr.bf16.mxu0 0
        %1539 = vmatpush1.bf16.msra.mxu0 0
        %1540 = vmatprep.subr.bf16.mxu0 0
        %1541 = vmatpush1.bf16.msra.mxu0 0
        %1542 = vmatprep.subr.bf16.mxu0 0
        %1543 = vmatpush1.bf16.msra.mxu0 0
        %1544 = vmatprep.subr.bf16.mxu0 0
        %1545 = vmatpush1.bf16.msra.mxu0 0
        %1546 = vmatprep.subr.bf16.mxu0 0
        %1547 = vmatpush1.bf16.msra.mxu0 0
        %1548 = vmatprep.subr.bf16.mxu0 0
        %1549 = vmatpush1.bf16.msra.mxu0 0
        %1550 = vmatprep.subr.bf16.mxu0 0
        %1551 = vmatpush1.bf16.msra.mxu0 0
        %1552 = vmatprep.subr.bf16.mxu0 0
        %1553 = vmatpush1.bf16.msra.mxu0 0
        %1554 = vmatprep.subr.bf16.mxu0 0
        %1555 = vmatpush1.bf16.msra.mxu0 0
        %1556 = vmatprep.subr.bf16.mxu0 0
        %1557 = vmatpush1.bf16.msra.mxu0 0
        %1558 = vmatprep.subr.bf16.mxu0 0
        %1559 = vmatpush1.bf16.msra.mxu0 0
        %1560 = vmatprep.subr.bf16.mxu0 0
        %1561 = vmatpush1.bf16.msra.mxu0 0
        %1562 = vmatprep.subr.bf16.mxu0 0
        %1563 = vmatpush1.bf16.msra.mxu0 0
        %1564 = vmatprep.mubr.bf16.mxu0 0
        %1565 = vmatmul.mubr.bf16.gmra.mrb[0].mxu0 %v1530
        %v1566 = vpop.f32.mrb[0].mxu0
        %v1567 = vadd.f32 %v1515, %v1566
        %v1568 = vpop.f32.mrb[0].mxu0
        %v1569 = vpop.f32.mrb[0].mxu0
        %v1570 = vpop.f32.mrb[0].mxu0
        %1571 = vdwg.mxu0
        %v1572 = vmul.f32 %v1567, 0.5
        %v1573 = vmul.f32 %v1567, 0.70710677
        %v1574 = verf.f32.pop %v1573
        %v1575 = vadd.f32 %v1574, 1.0
        %v1576 = vmul.f32 %v1572, %v1575
        %v1577 = vpack.c.bf16 %v1576, %v1576
        %v1578 = vld [vmem:[%s727] sm:$0xf]
        %v1579 = vld [vmem:[%s727 + $0x4] sm:$0xf]
        %v1580 = vld [vmem:[%s727 + $0x8] sm:$0xf]
        %v1581 = vld [vmem:[%s727 + $0xc] sm:$0xf]
        %v1582 = vld [vmem:[%s727 + $0x10] sm:$0xf]
        %v1583 = vld [vmem:[%s727 + $0x14] sm:$0xf]
        %v1584 = vld [vmem:[%s727 + $0x18] sm:$0xf]
        %v1585 = vld [vmem:[%s727 + $0x1c] sm:$0xf]
        %v1586 = vld [vmem:[%s735] sm:$0x1]
        %v1588 = vlaneseq
        %v1589 = vshrl.u32 %v1588, 7
        %v1590 = vsub.s32 0, %v1589
        %v1591 = vrot.slane %v1586, %v1590
        %v1601 = vunpack.c.l.b16 %v1578
        %v1602 = vunpack.c.l.b16 %v1579
        %v1603 = vunpack.c.l.b16 %v1580
        %v1604 = vunpack.c.l.b16 %v1581
        %v1605 = vunpack.c.l.b16 %v1582
        %v1606 = vunpack.c.l.b16 %v1583
        %v1607 = vunpack.c.l.b16 %v1584
        %v1608 = vunpack.c.l.b16 %v1585
        %v1609 = vpack.c.b16 %v1602, %v1601
        %v1610 = vpack.c.b16 %v1604, %v1603
        %v1611 = vpack.c.b16 %v1606, %v1605
        %v1612 = vpack.c.b16 %v1608, %v1607
        %vm1617 = vcmask 523264
        %v1619 = vsel %vm1617, %v1577, 0
        %1621 = vmatprep.subr.bf16.mxu0 0
        %1622 = vmatpush1.bf16.msra.mxu0 %v1609
        %1623 = vmatprep.subr.bf16.mxu0 0
        %1624 = vmatpush1.bf16.msra.mxu0 %v1610
        %1625 = vmatprep.subr.bf16.mxu0 0
        %1626 = vmatpush1.bf16.msra.mxu0 %v1611
        %1627 = vmatprep.subr.bf16.mxu0 0
        %1628 = vmatpush1.bf16.msra.mxu0 %v1612
        %1629 = vmatprep.subr.bf16.mxu0 0
        %1630 = vmatpush1.bf16.msra.mxu0 0
        %1631 = vmatprep.subr.bf16.mxu0 0
        %1632 = vmatpush1.bf16.msra.mxu0 0
        %1633 = vmatprep.subr.bf16.mxu0 0
        %1634 = vmatpush1.bf16.msra.mxu0 0
        %1635 = vmatprep.subr.bf16.mxu0 0
        %1636 = vmatpush1.bf16.msra.mxu0 0
        %1637 = vmatprep.subr.bf16.mxu0 0
        %1638 = vmatpush1.bf16.msra.mxu0 0
        %1639 = vmatprep.subr.bf16.mxu0 0
        %1640 = vmatpush1.bf16.msra.mxu0 0
        %1641 = vmatprep.subr.bf16.mxu0 0
        %1642 = vmatpush1.bf16.msra.mxu0 0
        %1643 = vmatprep.subr.bf16.mxu0 0
        %1644 = vmatpush1.bf16.msra.mxu0 0
        %1645 = vmatprep.subr.bf16.mxu0 0
        %1646 = vmatpush1.bf16.msra.mxu0 0
        %1647 = vmatprep.subr.bf16.mxu0 0
        %1648 = vmatpush1.bf16.msra.mxu0 0
        %1649 = vmatprep.subr.bf16.mxu0 0
        %1650 = vmatpush1.bf16.msra.mxu0 0
        %1651 = vmatprep.subr.bf16.mxu0 0
        %1652 = vmatpush1.bf16.msra.mxu0 0
        %1653 = vmatprep.mubr.bf16.mxu0 0
        %1654 = vmatmul.mubr.bf16.gmra.mrb[0].mxu0 %v1619
        %v1655 = vpop.f32.mrb[0].mxu0
        %v1656 = vadd.f32 %v1591, %v1655
        %v1657 = vpop.f32.mrb[0].mxu0
        %v1658 = vpop.f32.mrb[0].mxu0
        %v1659 = vpop.f32.mrb[0].mxu0
        %1660 = vdwg.mxu0
        %v1661 = vadd.f32 %v1475, %v1656
        %1662 = vst.msk [vmem:[#allocation2] sm:$0xff] %vm835, %v1661
        %p1663 = scmp.eq.s32.totalorder %s52, 1
        // Predicated region
        $region121: #{tpu_custom_call.1} parent=67 // pred_check
          %p1664 = pneg %p1663
        $region122: #{tpu_custom_call.1} parent=67 // pred_check_branch
          %1666 = sbr.rel (%p1664) target = $region124
        $region123: #{tpu_custom_call.1} parent=67 // pred_region
          %1667 = vst.msk [vmem:[%s823] sm:$0xff] %vm835, %v1661
        $region124: #{tpu_custom_call.1} parent=67 // pred_fallthru
          _
        %s1668 = sand.u32 %s379, 1
        %s1669 = scalar_lea.sflag [#allocation5], %s1668
        %s1670 = sand.u32 %s379, 1
        %s1671 = smul.addr %s1670, 8
        %s1672 = scalar_lea.vmem [#allocation23], %s1671
        // Predicated region
        $region125: #{tpu_custom_call.1} parent=67 // pred_check
          %p1673 = pneg %p389
        $region126: #{tpu_custom_call.1} parent=67 // pred_check_branch
          %1675 = sbr.rel (%p1673) target = $region128
        $region127: #{tpu_custom_call.1} parent=67 // pred_region
          %s1677 = ssub.s32 128, 128
          %1678 = vsyncadd %s1669, %s1677
          %s1679 = smul.addr %s51, 128
          %s1680 = scalar_lea.hbm %s12, %s1679
          %s1682 = sshll.u32 %s1672, 4
          %s1683 = int_to_ptr.vmem [resolvable:$true] %s1682
          %1685 = dma.vmem_to_hbm [thread:$0]  %s1683, 128, %s1680, %s1669
        $region128: #{tpu_custom_call.1} parent=67 // pred_fallthru
          _
      $region68: #{tpu_custom_call.1} parent=5 // pred_fallthru
        _
      %p1686 = scmp.le.s32.totalorder 2, %s42
      // Predicated region
      $region129: #{tpu_custom_call.1} parent=5 // pred_check
        %p1687 = pneg %p1686
      $region130: #{tpu_custom_call.1} parent=5 // pred_check_branch
        %1689 = sbr.rel (%p1687) target = $region132
      $region131: #{tpu_custom_call.1} parent=5 // pred_region
        %s1690 = ssub.s32 %s42, 2
        // Predicated region
        $region133: #{tpu_custom_call.1} parent=131 // pred_check
          %p1691 = pneg %p395
        $region134: #{tpu_custom_call.1} parent=131 // pred_check_branch
          %1693 = sbr.rel (%p1691) target = $region136
        $region135: #{tpu_custom_call.1} parent=131 // pred_region
          %s1694 = sand.u32 %s380, 1
          %s1695 = scalar_lea.sflag [#allocation5], %s1694
          %s1696 = sand.u32 %s380, 1
          %s1697 = smul.addr %s1696, 8
          %s1698 = scalar_lea.vmem [#allocation23], %s1697
          %1699 = dma.done %s1695, 128
        $region136: #{tpu_custom_call.1} parent=131 // pred_fallthru
          _
      $region132: #{tpu_custom_call.1} parent=5 // pred_fallthru
        _
    $region6: #{tpu_custom_call.1} parent=1 // loop_footer
      %s46 = sadd.s32 1, %s42
    $region7: #{tpu_custom_call.1} parent=1 // loop_footer_branch
      %41 = sbr.rel target = $region3
    $region8: #{tpu_custom_call.1} parent=1 // loop_exit
      _
    %1700 = vsyncpa [#allocation4], 1
    %s1701 = scalar_lea.sflag [#allocation4], 1
    %1702 = vsyncpa %s1701, 1
    %1703 = vsyncpa [#allocation7], 1
    %s1704 = scalar_lea.sflag [#allocation7], 1
    %1705 = vsyncpa %s1704, 1
    %1706 = vsyncpa [#allocation10], 1
    %s1707 = scalar_lea.sflag [#allocation10], 1
    %1708 = vsyncpa %s1707, 1
    %1709 = vsyncpa [#allocation13], 1
    %s1710 = scalar_lea.sflag [#allocation13], 1
    %1711 = vsyncpa %s1710, 1
    %1712 = vsyncpa [#allocation16], 1
    %s1713 = scalar_lea.sflag [#allocation16], 1
    %1714 = vsyncpa %s1713, 1
    %1715 = vsyncpa [#allocation19], 1
    %s1716 = scalar_lea.sflag [#allocation19], 1
    %1717 = vsyncpa %s1716, 1
    %1718 = vsyncpa [#allocation22], 1
    %s1719 = scalar_lea.sflag [#allocation22], 1
    %1720 = vsyncpa %s1719, 1
    %1721 = vsyncpa [#allocation5], 1
    %s1722 = scalar_lea.sflag [#allocation5], 1
    %1723 = vsyncpa %s1722, 1

</llo_original>
